<compile_context>
chip_gen: v7x
topology: tpu7x:2x2x1
jax: 0.10.0
libtpu: 0.0.40
codegen_flags: <defaults>
</compile_context>

<pallas_src>
import functools

import jax
import jax.numpy as jnp
from jax.experimental import pallas as pl
from jax.experimental.pallas import tpu as pltpu


def _round_up(x, m):
    return ((x + m - 1) // m) * m


# ----------------------------- Pallas kernels ------------------------------ #

def _conv_bn_kernel(p_ref, w_ref, shift_ref, o_ref, acc_ref, *, apply_relu):
    """acc += patches_tile @ W_tile (f32); epilogue: out = act(acc + shift)."""
    k = pl.program_id(1)

    @pl.when(k == 0)
    def _():
        acc_ref[...] = jnp.zeros_like(acc_ref)

    acc_ref[...] += jnp.dot(p_ref[...], w_ref[...],
                            preferred_element_type=jnp.float32)

    @pl.when(k == pl.num_programs(1) - 1)
    def _():
        y = acc_ref[...] + shift_ref[...]
        if apply_relu:
            y = jnp.maximum(y, 0.0)
        o_ref[...] = y.astype(o_ref.dtype)


def _conv_bn_add_relu_kernel(p_ref, w_ref, shift_ref, res_ref, o_ref, acc_ref):
    """acc += patches_tile @ W_tile; epilogue: out = relu(acc + shift + residual)."""
    k = pl.program_id(1)

    @pl.when(k == 0)
    def _():
        acc_ref[...] = jnp.zeros_like(acc_ref)

    acc_ref[...] += jnp.dot(p_ref[...], w_ref[...],
                            preferred_element_type=jnp.float32)

    @pl.when(k == pl.num_programs(1) - 1)
    def _():
        y = acc_ref[...] + shift_ref[...] + res_ref[...].astype(jnp.float32)
        y = jnp.maximum(y, 0.0)
        o_ref[...] = y.astype(o_ref.dtype)


# ------------------------------ Kernel wrapper ------------------------------ #

def conv_bn_matmul(patches, w_scaled, shift, *, relu, residual=None,
                   out_dtype=jnp.float32, tm_max=512, tk_max=512):
    """Fused conv(as matmul) + BN shift (+ residual) (+ ReLU) via pallas_call.

    patches  : [M, K]    any float dtype (cast to bf16 inside)
    w_scaled : [K, Cout] BN scale already folded in (bf16)
    shift    : [Cout]    f32 per-channel BN shift
    residual : [M, Cout] optional, added (as bf16 operand) in the f32 epilogue
    """
    M, K = patches.shape
    Kw, Cout = w_scaled.shape
    assert K == Kw, (K, Kw)

    # ---- lane/sublane-friendly padded geometry ---------------------------- #
    C_pad = _round_up(Cout, 128)                 # lane-dense output stores
    K_pad = _round_up(K, 128)                    # lane-dense LHS / full MXU feed
    if K_pad <= tk_max:
        tk = K_pad
    else:
        tk = 512 if K_pad % 512 == 0 else (256 if K_pad % 256 == 0 else 128)
    g_m = -(-M // tm_max)                        # number of M tiles
    tm = _round_up(-(-M // g_m), 16)             # sublane-aligned (bf16 packing)
    M_pad = g_m * tm

    patches_p = jnp.pad(patches, ((0, M_pad - M), (0, K_pad - K))).astype(jnp.bfloat16)
    w_p = jnp.pad(w_scaled.astype(jnp.bfloat16), ((0, K_pad - K), (0, C_pad - Cout)))
    shift_p = jnp.pad(shift.astype(jnp.float32).reshape(1, Cout),
                      ((0, 0), (0, C_pad - Cout)))

    in_specs = [
        pl.BlockSpec((tm, tk), lambda i, k: (i, k)),      # patches tile
        pl.BlockSpec((tk, C_pad), lambda i, k: (k, 0)),   # weight K-slice
        pl.BlockSpec((1, C_pad), lambda i, k: (0, 0)),    # BN shift
    ]
    args = [patches_p, w_p, shift_p]

    if residual is None:
        kernel = functools.partial(_conv_bn_kernel, apply_relu=relu)
        res_bytes = 0
    else:
        kernel = _conv_bn_add_relu_kernel
        res_p = jnp.pad(residual, ((0, M_pad - M), (0, C_pad - Cout))).astype(jnp.bfloat16)
        in_specs.append(pl.BlockSpec((tm, C_pad), lambda i, k: (i, 0)))
        args.append(res_p)
        res_bytes = tm * C_pad * 2

    # Explicit VMEM budget: double-buffered inputs/outputs + f32 accumulator.
    out_itemsize = jnp.dtype(out_dtype).itemsize
    tile_bytes = (tm * tk * 2 + tk * C_pad * 2 + C_pad * 4 + res_bytes
                  + tm * C_pad * out_itemsize)
    vmem_limit = int(min(max(4 * tile_bytes + tm * C_pad * 4, 16 << 20), 48 << 20))

    out_p = pl.pallas_call(
        kernel,
        out_shape=jax.ShapeDtypeStruct((M_pad, C_pad), out_dtype),
        grid=(M_pad // tm, K_pad // tk),
        in_specs=in_specs,
        out_specs=pl.BlockSpec((tm, C_pad), lambda i, k: (i, 0)),
        scratch_shapes=[pltpu.VMEM((tm, C_pad), jnp.float32)],
        compiler_params=pltpu.CompilerParams(
            dimension_semantics=("parallel", "arbitrary"),
            vmem_limit_bytes=vmem_limit,
        ),
    )(*args)
    return out_p[:M, :Cout]


# ------------------------------ JAX glue ------------------------------------ #

def im2col(x_nhwc, kh, kw, stride, padding):
    """x_nhwc [N,H,W,C] -> patches [N*OH*OW, kh*kw*C] (row-major over N,OH,OW)."""
    N, H, W, C = x_nhwc.shape
    xp = jnp.pad(x_nhwc, ((0, 0), (padding, padding), (padding, padding), (0, 0)))
    OH = (H + 2 * padding - kh) // stride + 1
    OW = (W + 2 * padding - kw) // stride + 1
    cols = []
    for i in range(kh):
        for j in range(kw):
            cols.append(xp[:, i:i + stride * OH:stride, j:j + stride * OW:stride, :])
    patches = jnp.concatenate(cols, axis=-1)          # [N, OH, OW, kh*kw*C]
    return patches.reshape(N * OH * OW, kh * kw * C), OH, OW


def fold_bn(gamma, beta, running_mean, running_var, eps=1e-5):
    scale = gamma / jnp.sqrt(running_var + eps)
    shift = beta - running_mean * scale
    return scale, shift


def fuse_conv_bn(w_oihw, bn, eps=1e-5):
    """PyTorch conv weight [Cout,Cin,KH,KW] + BN stats -> (bf16 scaled weight [K,Cout], f32 shift)."""
    scale, shift = fold_bn(*bn, eps=eps)
    cout, cin, kh, kw = w_oihw.shape
    w_mat = jnp.transpose(w_oihw, (2, 3, 1, 0)).reshape(kh * kw * cin, cout)
    w_scaled = (w_mat * scale[None, :]).astype(jnp.bfloat16)   # one-time constant fold
    return w_scaled, shift.astype(jnp.float32)


def basic_block_forward(x_nchw, params, *, kernel_size, stride, padding):
    # NCHW -> NHWC, bf16 operands for the MXU (f32 accumulation happens in-kernel).
    x = jnp.transpose(x_nchw, (0, 2, 3, 1)).astype(jnp.bfloat16)
    N, H, W, Cin = x.shape
    cout = params["w1_mat"].shape[1]

    # conv1 + bn1 + relu  (intermediate kept bf16 to halve its HBM round-trip)
    p1, OH, OW = im2col(x, kernel_size, kernel_size, stride, padding)
    out1 = conv_bn_matmul(p1, params["w1_mat"], params["b1"], relu=True,
                          out_dtype=jnp.bfloat16)
    out1_nhwc = out1.reshape(N, OH, OW, cout)

    # residual path
    if stride > 1:
        pd, _, _ = im2col(x, 1, 1, stride, 0)
        residual = conv_bn_matmul(pd, params["wd_mat"], params["bd"], relu=False,
                                  out_dtype=jnp.bfloat16)
    else:
        # TODO(synk): identity residual requires in_planes == out_planes (standard ResNet stride-1 block).
        assert Cin == cout, "stride=1 identity residual requires in_planes == out_planes"
        residual = x.reshape(N * H * W, Cin)

    # conv2 + bn2 + residual add + relu (fused epilogue)
    p2, OH2, OW2 = im2col(out1_nhwc, kernel_size, kernel_size, 1, padding)
    out = conv_bn_matmul(p2, params["w2_mat"], params["b2"], relu=True,
                         residual=residual, out_dtype=jnp.float32)

    out_nhwc = out.reshape(N, OH2, OW2, cout)
    return jnp.transpose(out_nhwc, (0, 3, 1, 2)).astype(x_nchw.dtype)  # NHWC -> NCHW


# ------------------------------ Parameters ----------------------------------- #

def init_params(key, in_planes, out_planes, kernel_size, stride):
    ks = jax.random.split(key, 16)

    def bn_stats(k0, k1, k2, k3, c):
        gamma = 1.0 + 0.1 * jax.random.normal(k0, (c,), jnp.float32)
        beta = 0.1 * jax.random.normal(k1, (c,), jnp.float32)
        rmean = 0.1 * jax.random.normal(k2, (c,), jnp.float32)
        rvar = 1.0 + 0.1 * jax.random.uniform(k3, (c,), jnp.float32)
        return (gamma, beta, rmean, rvar)

    w1 = 0.1 * jax.random.normal(ks[0], (out_planes, in_planes, kernel_size, kernel_size), jnp.float32)
    w2 = 0.1 * jax.random.normal(ks[1], (out_planes, out_planes, kernel_size, kernel_size), jnp.float32)
    w1_mat, b1 = fuse_conv_bn(w1, bn_stats(ks[2], ks[3], ks[4], ks[5], out_planes))
    w2_mat, b2 = fuse_conv_bn(w2, bn_stats(ks[6], ks[7], ks[8], ks[9], out_planes))
    params = {"w1_mat": w1_mat, "b1": b1, "w2_mat": w2_mat, "b2": b2}
    if stride > 1:
        wd = 0.1 * jax.random.normal(ks[10], (out_planes, in_planes, 1, 1), jnp.float32)
        wd_mat, bd = fuse_conv_bn(wd, bn_stats(ks[11], ks[12], ks[13], ks[14], out_planes))
        params["wd_mat"] = wd_mat
        params["bd"] = bd
    return params


# --------------------------------- Main -------------------------------------- #

if __name__ == "__main__":
    key = jax.random.PRNGKey(0)
    k_x, k_p = jax.random.split(key)

    N, Cin, H, W = 2, 4, 16, 16
    Cout, kernel_size, stride, padding = 8, 3, 2, 1   # stride>1 -> downsample path exercised

    x = jax.random.normal(k_x, (N, Cin, H, W), jnp.float32)
    params = init_params(k_p, Cin, Cout, kernel_size, stride)

    fwd = jax.jit(functools.partial(basic_block_forward, kernel_size=kernel_size,
                                    stride=stride, padding=padding))
    out = fwd(x, params)
    jax.block_until_ready(out)

    assert out.shape == (N, Cout, H // stride, W // stride), out.shape
    print("KERNEL_OK")
</pallas_src>

<mosaic_0001>
module attributes {stable_mosaic.version = 11 : i64} {
  func.func @_conv_bn_kernel(%arg0: i32, %arg1: i32, %arg2: memref<128x128xbf16, #tpu.memory_space<vmem>>, %arg3: memref<128x128xbf16, #tpu.memory_space<vmem>>, %arg4: memref<1x128xf32, #tpu.memory_space<vmem>>, %arg5: memref<128x128xbf16, #tpu.memory_space<vmem>>, %arg6: memref<128x128xf32, #tpu.memory_space<vmem>>) attributes {dimension_semantics = [#tpu.dimension_semantics<parallel>, #tpu.dimension_semantics<arbitrary>], iteration_bounds = array<i64: 1, 1>, scalar_prefetch = 0 : i64, scratch_operands = 1 : i64, tpu.core_type = #tpu.core_type<tc>, window_params = [{transform_indices = @transform_0, window_bounds = array<i64: 128, 128>}, {transform_indices = @transform_1, window_bounds = array<i64: 128, 128>}, {pipeline_mode = #tpu.pipeline_mode<synchronous>, transform_indices = @transform_2, window_bounds = array<i64: 1, 128>}, {transform_indices = @transform_3, window_bounds = array<i64: 128, 128>}]} {
    %c0_i32 = arith.constant 0 : i32
    %0 = arith.cmpi eq, %arg1, %c0_i32 : i32
    %1 = arith.extui %0 : i1 to i32
    %c0_i32_0 = arith.constant 0 : i32
    %2 = arith.cmpi ne, %1, %c0_i32_0 : i32
    scf.if %2 {
      %cst_10 = arith.constant 0.000000e+00 : f32
      %12 = vector.broadcast %cst_10 : f32 to vector<128x128xf32>
      %c0_11 = arith.constant 0 : index
      %c0_12 = arith.constant 0 : index
      %13 = vector.load %arg6[%c0_11, %c0_12] : memref<128x128xf32, #tpu.memory_space<vmem>>, vector<128x128xf32>
      tpu.vector_store %arg6[%c0_11, %c0_12], %12 {strides = array<i32>} : memref<128x128xf32, #tpu.memory_space<vmem>>, vector<128x128xf32>,
    } else {
    }
    %c0 = arith.constant 0 : index
    %c0_1 = arith.constant 0 : index
    %3 = vector.load %arg6[%c0, %c0_1] : memref<128x128xf32, #tpu.memory_space<vmem>>, vector<128x128xf32>
    %c0_2 = arith.constant 0 : index
    %c0_3 = arith.constant 0 : index
    %4 = vector.load %arg2[%c0_2, %c0_3] : memref<128x128xbf16, #tpu.memory_space<vmem>>, vector<128x128xbf16>
    %c0_4 = arith.constant 0 : index
    %c0_5 = arith.constant 0 : index
    %5 = vector.load %arg3[%c0_4, %c0_5] : memref<128x128xbf16, #tpu.memory_space<vmem>>, vector<128x128xbf16>
    %cst = arith.constant dense<0.000000e+00> : vector<128x128xf32>
    %6 = tpu.matmul %4, %5, %cst {dimension_numbers = #tpu.dot_dimension_numbers<[1], [0], [0], [1], [0, 0, 1, 1], [], []>} : vector<128x128xbf16>, vector<128x128xbf16>, vector<128x128xf32> -> vector<128x128xf32>
    %7 = arith.addf %3, %6 : vector<128x128xf32>
    %c0_6 = arith.constant 0 : index
    %c0_7 = arith.constant 0 : index
    %8 = vector.load %arg6[%c0_6, %c0_7] : memref<128x128xf32, #tpu.memory_space<vmem>>, vector<128x128xf32>
    tpu.vector_store %arg6[%c0_6, %c0_7], %7 {strides = array<i32>} : memref<128x128xf32, #tpu.memory_space<vmem>>, vector<128x128xf32>,
    %c0_i32_8 = arith.constant 0 : i32
    %9 = arith.cmpi eq, %arg1, %c0_i32_8 : i32
    %10 = arith.extui %9 : i1 to i32
    %c0_i32_9 = arith.constant 0 : i32
    %11 = arith.cmpi ne, %10, %c0_i32_9 : i32
    scf.if %11 {
      %c0_10 = arith.constant 0 : index
      %c0_11 = arith.constant 0 : index
      %12 = vector.load %arg6[%c0_10, %c0_11] : memref<128x128xf32, #tpu.memory_space<vmem>>, vector<128x128xf32>
      %c0_12 = arith.constant 0 : index
      %c0_13 = arith.constant 0 : index
      %13 = vector.load %arg4[%c0_12, %c0_13] : memref<1x128xf32, #tpu.memory_space<vmem>>, vector<1x128xf32>
      %14 = vector.broadcast %13 : vector<1x128xf32> to vector<128x128xf32>
      %15 = arith.addf %12, %14 : vector<128x128xf32>
      %cst_14 = arith.constant 0.000000e+00 : f32
      %16 = vector.broadcast %cst_14 : f32 to vector<128x128xf32>
      %17 = arith.maximumf %15, %16 : vector<128x128xf32>
      %18 = arith.truncf %17 : vector<128x128xf32> to vector<128x128xbf16>
      %c0_15 = arith.constant 0 : index
      %c0_16 = arith.constant 0 : index
      %19 = vector.load %arg5[%c0_15, %c0_16] : memref<128x128xbf16, #tpu.memory_space<vmem>>, vector<128x128xbf16>
      tpu.vector_store %arg5[%c0_15, %c0_16], %18 {strides = array<i32>} : memref<128x128xbf16, #tpu.memory_space<vmem>>, vector<128x128xbf16>,
    } else {
    }
    return
  }
  func.func @transform_0(%arg0: i32, %arg1: i32) -> (i32, i32) {
    %c0_i32 = arith.constant 0 : i32
    return %arg0, %arg1 : i32, i32
  }
  func.func @transform_1(%arg0: i32, %arg1: i32) -> (i32, i32) {
    %c0_i32 = arith.constant 0 : i32
    %c0_i32_0 = arith.constant 0 : i32
    return %arg1, %c0_i32 : i32, i32
  }
  func.func @transform_2(%arg0: i32, %arg1: i32) -> (i32, i32) {
    %c0_i32 = arith.constant 0 : i32
    %c0_i32_0 = arith.constant 0 : i32
    %c0_i32_1 = arith.constant 0 : i32
    return %c0_i32, %c0_i32_0 : i32, i32
  }
  func.func @transform_3(%arg0: i32, %arg1: i32) -> (i32, i32) {
    %c0_i32 = arith.constant 0 : i32
    %c0_i32_0 = arith.constant 0 : i32
    return %arg0, %c0_i32 : i32, i32
  }
}

module attributes {stable_mosaic.version = 11 : i64} {
  func.func @_conv_bn_kernel(%arg0: i32, %arg1: i32, %arg2: memref<128x128xbf16, #tpu.memory_space<vmem>>, %arg3: memref<128x128xbf16, #tpu.memory_space<vmem>>, %arg4: memref<1x128xf32, #tpu.memory_space<vmem>>, %arg5: memref<128x128xbf16, #tpu.memory_space<vmem>>, %arg6: memref<128x128xf32, #tpu.memory_space<vmem>>) attributes {dimension_semantics = [#tpu.dimension_semantics<parallel>, #tpu.dimension_semantics<arbitrary>], iteration_bounds = array<i64: 1, 1>, scalar_prefetch = 0 : i64, scratch_operands = 1 : i64, tpu.core_type = #tpu.core_type<tc>, window_params = [{transform_indices = @transform_0, window_bounds = array<i64: 128, 128>}, {transform_indices = @transform_1, window_bounds = array<i64: 128, 128>}, {pipeline_mode = #tpu.pipeline_mode<synchronous>, transform_indices = @transform_2, window_bounds = array<i64: 1, 128>}, {transform_indices = @transform_3, window_bounds = array<i64: 128, 128>}]} {
    %c0_i32 = arith.constant 0 : i32
    %0 = arith.cmpi eq, %arg1, %c0_i32 : i32
    %1 = arith.extui %0 : i1 to i32
    %c0_i32_0 = arith.constant 0 : i32
    %2 = arith.cmpi ne, %1, %c0_i32_0 : i32
    scf.if %2 {
      %cst_10 = arith.constant 0.000000e+00 : f32
      %12 = vector.broadcast %cst_10 : f32 to vector<128x128xf32>
      %c0_11 = arith.constant 0 : index
      %c0_12 = arith.constant 0 : index
      %13 = vector.load %arg6[%c0_11, %c0_12] : memref<128x128xf32, #tpu.memory_space<vmem>>, vector<128x128xf32>
      tpu.vector_store %arg6[%c0_11, %c0_12], %12 {strides = array<i32>} : memref<128x128xf32, #tpu.memory_space<vmem>>, vector<128x128xf32>,
    } else {
    }
    %c0 = arith.constant 0 : index
    %c0_1 = arith.constant 0 : index
    %3 = vector.load %arg6[%c0, %c0_1] : memref<128x128xf32, #tpu.memory_space<vmem>>, vector<128x128xf32>
    %c0_2 = arith.constant 0 : index
    %c0_3 = arith.constant 0 : index
    %4 = vector.load %arg2[%c0_2, %c0_3] : memref<128x128xbf16, #tpu.memory_space<vmem>>, vector<128x128xbf16>
    %c0_4 = arith.constant 0 : index
    %c0_5 = arith.constant 0 : index
    %5 = vector.load %arg3[%c0_4, %c0_5] : memref<128x128xbf16, #tpu.memory_space<vmem>>, vector<128x128xbf16>
    %cst = arith.constant dense<0.000000e+00> : vector<128x128xf32>
    %6 = tpu.matmul %4, %5, %cst {dimension_numbers = #tpu.dot_dimension_numbers<[1], [0], [0], [1], [0, 0, 1, 1], [], []>} : vector<128x128xbf16>, vector<128x128xbf16>, vector<128x128xf32> -> vector<128x128xf32>
    %7 = arith.addf %3, %6 : vector<128x128xf32>
    %c0_6 = arith.constant 0 : index
    %c0_7 = arith.constant 0 : index
    %8 = vector.load %arg6[%c0_6, %c0_7] : memref<128x128xf32, #tpu.memory_space<vmem>>, vector<128x128xf32>
    tpu.vector_store %arg6[%c0_6, %c0_7], %7 {strides = array<i32>} : memref<128x128xf32, #tpu.memory_space<vmem>>, vector<128x128xf32>,
    %c0_i32_8 = arith.constant 0 : i32
    %9 = arith.cmpi eq, %arg1, %c0_i32_8 : i32
    %10 = arith.extui %9 : i1 to i32
    %c0_i32_9 = arith.constant 0 : i32
    %11 = arith.cmpi ne, %10, %c0_i32_9 : i32
    scf.if %11 {
      %c0_10 = arith.constant 0 : index
      %c0_11 = arith.constant 0 : index
      %12 = vector.load %arg6[%c0_10, %c0_11] : memref<128x128xf32, #tpu.memory_space<vmem>>, vector<128x128xf32>
      %c0_12 = arith.constant 0 : index
      %c0_13 = arith.constant 0 : index
      %13 = vector.load %arg4[%c0_12, %c0_13] : memref<1x128xf32, #tpu.memory_space<vmem>>, vector<1x128xf32>
      %14 = vector.broadcast %13 : vector<1x128xf32> to vector<128x128xf32>
      %15 = arith.addf %12, %14 : vector<128x128xf32>
      %16 = arith.truncf %15 : vector<128x128xf32> to vector<128x128xbf16>
      %c0_14 = arith.constant 0 : index
      %c0_15 = arith.constant 0 : index
      %17 = vector.load %arg5[%c0_14, %c0_15] : memref<128x128xbf16, #tpu.memory_space<vmem>>, vector<128x128xbf16>
      tpu.vector_store %arg5[%c0_14, %c0_15], %16 {strides = array<i32>} : memref<128x128xbf16, #tpu.memory_space<vmem>>, vector<128x128xbf16>,
    } else {
    }
    return
  }
  func.func @transform_0(%arg0: i32, %arg1: i32) -> (i32, i32) {
    %c0_i32 = arith.constant 0 : i32
    return %arg0, %arg1 : i32, i32
  }
  func.func @transform_1(%arg0: i32, %arg1: i32) -> (i32, i32) {
    %c0_i32 = arith.constant 0 : i32
    %c0_i32_0 = arith.constant 0 : i32
    return %arg1, %c0_i32 : i32, i32
  }
  func.func @transform_2(%arg0: i32, %arg1: i32) -> (i32, i32) {
    %c0_i32 = arith.constant 0 : i32
    %c0_i32_0 = arith.constant 0 : i32
    %c0_i32_1 = arith.constant 0 : i32
    return %c0_i32, %c0_i32_0 : i32, i32
  }
  func.func @transform_3(%arg0: i32, %arg1: i32) -> (i32, i32) {
    %c0_i32 = arith.constant 0 : i32
    %c0_i32_0 = arith.constant 0 : i32
    return %arg0, %c0_i32 : i32, i32
  }
}

module attributes {stable_mosaic.version = 11 : i64} {
  func.func @_conv_bn_add_relu_kernel(%arg0: i32, %arg1: i32, %arg2: memref<128x128xbf16, #tpu.memory_space<vmem>>, %arg3: memref<128x128xbf16, #tpu.memory_space<vmem>>, %arg4: memref<1x128xf32, #tpu.memory_space<vmem>>, %arg5: memref<128x128xbf16, #tpu.memory_space<vmem>>, %arg6: memref<128x128xf32, #tpu.memory_space<vmem>>, %arg7: memref<128x128xf32, #tpu.memory_space<vmem>>) attributes {dimension_semantics = [#tpu.dimension_semantics<parallel>, #tpu.dimension_semantics<arbitrary>], iteration_bounds = array<i64: 1, 1>, scalar_prefetch = 0 : i64, scratch_operands = 1 : i64, tpu.core_type = #tpu.core_type<tc>, window_params = [{transform_indices = @transform_0, window_bounds = array<i64: 128, 128>}, {transform_indices = @transform_1, window_bounds = array<i64: 128, 128>}, {pipeline_mode = #tpu.pipeline_mode<synchronous>, transform_indices = @transform_2, window_bounds = array<i64: 1, 128>}, {transform_indices = @transform_3, window_bounds = array<i64: 128, 128>}, {transform_indices = @transform_4, window_bounds = array<i64: 128, 128>}]} {
    %c0_i32 = arith.constant 0 : i32
    %0 = arith.cmpi eq, %arg1, %c0_i32 : i32
    %1 = arith.extui %0 : i1 to i32
    %c0_i32_0 = arith.constant 0 : i32
    %2 = arith.cmpi ne, %1, %c0_i32_0 : i32
    scf.if %2 {
      %cst_10 = arith.constant 0.000000e+00 : f32
      %12 = vector.broadcast %cst_10 : f32 to vector<128x128xf32>
      %c0_11 = arith.constant 0 : index
      %c0_12 = arith.constant 0 : index
      %13 = vector.load %arg7[%c0_11, %c0_12] : memref<128x128xf32, #tpu.memory_space<vmem>>, vector<128x128xf32>
      tpu.vector_store %arg7[%c0_11, %c0_12], %12 {strides = array<i32>} : memref<128x128xf32, #tpu.memory_space<vmem>>, vector<128x128xf32>,
    } else {
    }
    %c0 = arith.constant 0 : index
    %c0_1 = arith.constant 0 : index
    %3 = vector.load %arg7[%c0, %c0_1] : memref<128x128xf32, #tpu.memory_space<vmem>>, vector<128x128xf32>
    %c0_2 = arith.constant 0 : index
    %c0_3 = arith.constant 0 : index
    %4 = vector.load %arg2[%c0_2, %c0_3] : memref<128x128xbf16, #tpu.memory_space<vmem>>, vector<128x128xbf16>
    %c0_4 = arith.constant 0 : index
    %c0_5 = arith.constant 0 : index
    %5 = vector.load %arg3[%c0_4, %c0_5] : memref<128x128xbf16, #tpu.memory_space<vmem>>, vector<128x128xbf16>
    %cst = arith.constant dense<0.000000e+00> : vector<128x128xf32>
    %6 = tpu.matmul %4, %5, %cst {dimension_numbers = #tpu.dot_dimension_numbers<[1], [0], [0], [1], [0, 0, 1, 1], [], []>} : vector<128x128xbf16>, vector<128x128xbf16>, vector<128x128xf32> -> vector<128x128xf32>
    %7 = arith.addf %3, %6 : vector<128x128xf32>
    %c0_6 = arith.constant 0 : index
    %c0_7 = arith.constant 0 : index
    %8 = vector.load %arg7[%c0_6, %c0_7] : memref<128x128xf32, #tpu.memory_space<vmem>>, vector<128x128xf32>
    tpu.vector_store %arg7[%c0_6, %c0_7], %7 {strides = array<i32>} : memref<128x128xf32, #tpu.memory_space<vmem>>, vector<128x128xf32>,
    %c0_i32_8 = arith.constant 0 : i32
    %9 = arith.cmpi eq, %arg1, %c0_i32_8 : i32
    %10 = arith.extui %9 : i1 to i32
    %c0_i32_9 = arith.constant 0 : i32
    %11 = arith.cmpi ne, %10, %c0_i32_9 : i32
    scf.if %11 {
      %c0_10 = arith.constant 0 : index
      %c0_11 = arith.constant 0 : index
      %12 = vector.load %arg7[%c0_10, %c0_11] : memref<128x128xf32, #tpu.memory_space<vmem>>, vector<128x128xf32>
      %c0_12 = arith.constant 0 : index
      %c0_13 = arith.constant 0 : index
      %13 = vector.load %arg4[%c0_12, %c0_13] : memref<1x128xf32, #tpu.memory_space<vmem>>, vector<1x128xf32>
      %14 = vector.broadcast %13 : vector<1x128xf32> to vector<128x128xf32>
      %15 = arith.addf %12, %14 : vector<128x128xf32>
      %c0_14 = arith.constant 0 : index
      %c0_15 = arith.constant 0 : index
      %16 = vector.load %arg5[%c0_14, %c0_15] : memref<128x128xbf16, #tpu.memory_space<vmem>>, vector<128x128xbf16>
      %17 = arith.extf %16 : vector<128x128xbf16> to vector<128x128xf32>
      %18 = arith.addf %15, %17 : vector<128x128xf32>
      %cst_16 = arith.constant 0.000000e+00 : f32
      %19 = vector.broadcast %cst_16 : f32 to vector<128x128xf32>
      %20 = arith.maximumf %18, %19 : vector<128x128xf32>
      %c0_17 = arith.constant 0 : index
      %c0_18 = arith.constant 0 : index
      %21 = vector.load %arg6[%c0_17, %c0_18] : memref<128x128xf32, #tpu.memory_space<vmem>>, vector<128x128xf32>
      tpu.vector_store %arg6[%c0_17, %c0_18], %20 {strides = array<i32>} : memref<128x128xf32, #tpu.memory_space<vmem>>, vector<128x128xf32>,
    } else {
    }
    return
  }
  func.func @transform_0(%arg0: i32, %arg1: i32) -> (i32, i32) {
    %c0_i32 = arith.constant 0 : i32
    return %arg0, %arg1 : i32, i32
  }
  func.func @transform_1(%arg0: i32, %arg1: i32) -> (i32, i32) {
    %c0_i32 = arith.constant 0 : i32
    %c0_i32_0 = arith.constant 0 : i32
    return %arg1, %c0_i32 : i32, i32
  }
  func.func @transform_2(%arg0: i32, %arg1: i32) -> (i32, i32) {
    %c0_i32 = arith.constant 0 : i32
    %c0_i32_0 = arith.constant 0 : i32
    %c0_i32_1 = arith.constant 0 : i32
    return %c0_i32, %c0_i32_0 : i32, i32
  }
  func.func @transform_3(%arg0: i32, %arg1: i32) -> (i32, i32) {
    %c0_i32 = arith.constant 0 : i32
    %c0_i32_0 = arith.constant 0 : i32
    return %arg0, %c0_i32 : i32, i32
  }
  func.func @transform_4(%arg0: i32, %arg1: i32) -> (i32, i32) {
    %c0_i32 = arith.constant 0 : i32
    %c0_i32_0 = arith.constant 0 : i32
    return %arg0, %c0_i32 : i32, i32
  }
}

</mosaic_0001>

<llo_original>
// kernel: basic_block_forward.3
$region0: #{basic_block_forward.3}
  #allocation0 [shape = 'u32[]', space=smem, size = 0x4, offset = 0x4, fixed_abs, tag = 'smem constant byte address 0x4 - core index']
  #allocation1 [shape = 'u32[144,128]{1,0:T(1,128)}', space=vmem, size = 0x12000, scoped, tag = 'internal scratch']
  #allocation2 [shape = 'f32[128,128]{1,0:T(8,128)}', space=vmem, size = 0x10000, scoped, tag = 'scratch operand']
  %s0 = inlined_call_operand.vmem [shape: bf16[128,128], index: 0, kind: input, shape index: {}]
  %s1 = inlined_call_operand.vmem [shape: bf16[128,128], index: 1, kind: input, shape index: {}]
  %s2 = inlined_call_operand.vmem [shape: f32[1,128], index: 2, kind: input, shape index: {}]
  %s3 = inlined_call_operand.vmem [shape: bf16[128,128], index: 3, kind: output, shape index: {}]
  %s4 = sld [smem:[#allocation0]]
  $region30: #{basic_block_forward.3} parent=0
    _
  %s6 = ssub.s32 1, %s4
  %s7 = scalar_select 0, %s6, %s4
  // Predicated region
  $region2: #{basic_block_forward.3} parent=0 // pred_check
    _
  $region3: #{basic_block_forward.3} parent=0 // pred_check_branch
    %9 = sbr.rel (0) target = $region5
  $region4: #{basic_block_forward.3} parent=0 // pred_region
    _
  $region5: #{basic_block_forward.3} parent=0 // pred_fallthru
    _
  // Predicated region
  $region6: #{basic_block_forward.3} parent=0 // pred_check
    _
  $region7: #{basic_block_forward.3} parent=0 // pred_check_branch
    %11 = sbr.rel (0) target = $region9
  $region8: #{basic_block_forward.3} parent=0 // pred_region
    _
  $region9: #{basic_block_forward.3} parent=0 // pred_fallthru
    _
  // Predicated region
  $region10: #{basic_block_forward.3} parent=0 // pred_check
    _
  $region11: #{basic_block_forward.3} parent=0 // pred_check_branch
    %13 = sbr.rel (0) target = $region13
  $region12: #{basic_block_forward.3} parent=0 // pred_region
    _
  $region13: #{basic_block_forward.3} parent=0 // pred_fallthru
    _
  %p15 = scmp.eq.s32.totalorder 0, 0
  // Predicated region
  $region14: #{basic_block_forward.3} parent=0 // pred_check
    %p16 = pneg %p15
  $region15: #{basic_block_forward.3} parent=0 // pred_check_branch
    %18 = sbr.rel (%p16) target = $region17
  $region16: #{basic_block_forward.3} parent=0 // pred_region
    %19 = vst [vmem:[#allocation2] sm:$0xff] 0.0
    %20 = vst [vmem:[#allocation2 + $0x8] sm:$0xff] 0.0
    %21 = vst [vmem:[#allocation2 + $0x10] sm:$0xff] 0.0
    %22 = vst [vmem:[#allocation2 + $0x18] sm:$0xff] 0.0
    %23 = vst [vmem:[#allocation2 + $0x20] sm:$0xff] 0.0
    %24 = vst [vmem:[#allocation2 + $0x28] sm:$0xff] 0.0
    %25 = vst [vmem:[#allocation2 + $0x30] sm:$0xff] 0.0
    %26 = vst [vmem:[#allocation2 + $0x38] sm:$0xff] 0.0
    %27 = vst [vmem:[#allocation2 + $0x40] sm:$0xff] 0.0
    %28 = vst [vmem:[#allocation2 + $0x48] sm:$0xff] 0.0
    %29 = vst [vmem:[#allocation2 + $0x50] sm:$0xff] 0.0
    %30 = vst [vmem:[#allocation2 + $0x58] sm:$0xff] 0.0
    %31 = vst [vmem:[#allocation2 + $0x60] sm:$0xff] 0.0
    %32 = vst [vmem:[#allocation2 + $0x68] sm:$0xff] 0.0
    %33 = vst [vmem:[#allocation2 + $0x70] sm:$0xff] 0.0
    %34 = vst [vmem:[#allocation2 + $0x78] sm:$0xff] 0.0
  $region17: #{basic_block_forward.3} parent=0 // pred_fallthru
    _
  %v35 = vld [vmem:[#allocation2] sm:$0xff]
  %v36 = vld [vmem:[#allocation2 + $0x8] sm:$0xff]
  %v37 = vld [vmem:[#allocation2 + $0x10] sm:$0xff]
  %v38 = vld [vmem:[#allocation2 + $0x18] sm:$0xff]
  %v39 = vld [vmem:[#allocation2 + $0x20] sm:$0xff]
  %v40 = vld [vmem:[#allocation2 + $0x28] sm:$0xff]
  %v41 = vld [vmem:[#allocation2 + $0x30] sm:$0xff]
  %v42 = vld [vmem:[#allocation2 + $0x38] sm:$0xff]
  %v43 = vld [vmem:[#allocation2 + $0x40] sm:$0xff]
  %v44 = vld [vmem:[#allocation2 + $0x48] sm:$0xff]
  %v45 = vld [vmem:[#allocation2 + $0x50] sm:$0xff]
  %v46 = vld [vmem:[#allocation2 + $0x58] sm:$0xff]
  %v47 = vld [vmem:[#allocation2 + $0x60] sm:$0xff]
  %v48 = vld [vmem:[#allocation2 + $0x68] sm:$0xff]
  %v49 = vld [vmem:[#allocation2 + $0x70] sm:$0xff]
  %v50 = vld [vmem:[#allocation2 + $0x78] sm:$0xff]
  %v51 = vld [vmem:[%s0] sm:$0xf]
  %v52 = vld [vmem:[%s0 + $0x4] sm:$0xf]
  %v53 = vld [vmem:[%s0 + $0x8] sm:$0xf]
  %v54 = vld [vmem:[%s0 + $0xc] sm:$0xf]
  %v55 = vld [vmem:[%s0 + $0x10] sm:$0xf]
  %v56 = vld [vmem:[%s0 + $0x14] sm:$0xf]
  %v57 = vld [vmem:[%s0 + $0x18] sm:$0xf]
  %v58 = vld [vmem:[%s0 + $0x1c] sm:$0xf]
  %v59 = vld [vmem:[%s0 + $0x20] sm:$0xf]
  %v60 = vld [vmem:[%s0 + $0x24] sm:$0xf]
  %v61 = vld [vmem:[%s0 + $0x28] sm:$0xf]
  %v62 = vld [vmem:[%s0 + $0x2c] sm:$0xf]
  %v63 = vld [vmem:[%s0 + $0x30] sm:$0xf]
  %v64 = vld [vmem:[%s0 + $0x34] sm:$0xf]
  %v65 = vld [vmem:[%s0 + $0x38] sm:$0xf]
  %v66 = vld [vmem:[%s0 + $0x3c] sm:$0xf]
  %v67 = vld [vmem:[%s1] sm:$0xf]
  %v68 = vld [vmem:[%s1 + $0x4] sm:$0xf]
  %v69 = vld [vmem:[%s1 + $0x8] sm:$0xf]
  %v70 = vld [vmem:[%s1 + $0xc] sm:$0xf]
  %v71 = vld [vmem:[%s1 + $0x10] sm:$0xf]
  %v72 = vld [vmem:[%s1 + $0x14] sm:$0xf]
  %v73 = vld [vmem:[%s1 + $0x18] sm:$0xf]
  %v74 = vld [vmem:[%s1 + $0x1c] sm:$0xf]
  %v75 = vld [vmem:[%s1 + $0x20] sm:$0xf]
  %v76 = vld [vmem:[%s1 + $0x24] sm:$0xf]
  %v77 = vld [vmem:[%s1 + $0x28] sm:$0xf]
  %v78 = vld [vmem:[%s1 + $0x2c] sm:$0xf]
  %v79 = vld [vmem:[%s1 + $0x30] sm:$0xf]
  %v80 = vld [vmem:[%s1 + $0x34] sm:$0xf]
  %v81 = vld [vmem:[%s1 + $0x38] sm:$0xf]
  %v82 = vld [vmem:[%s1 + $0x3c] sm:$0xf]
  %v99 = vunpack.c.l.b16 %v51
  %v100 = vunpack.c.l.b16 %v52
  %v101 = vunpack.c.l.b16 %v53
  %v102 = vunpack.c.l.b16 %v54
  %v103 = vunpack.c.l.b16 %v55
  %v104 = vunpack.c.l.b16 %v56
  %v105 = vunpack.c.l.b16 %v57
  %v106 = vunpack.c.l.b16 %v58
  %v107 = vunpack.c.l.b16 %v59
  %v108 = vunpack.c.l.b16 %v60
  %v109 = vunpack.c.l.b16 %v61
  %v110 = vunpack.c.l.b16 %v62
  %v111 = vunpack.c.l.b16 %v63
  %v112 = vunpack.c.l.b16 %v64
  %v113 = vunpack.c.l.b16 %v65
  %v114 = vunpack.c.l.b16 %v66
  %v115 = vpack.c.b16 %v100, %v99
  %v116 = vpack.c.b16 %v102, %v101
  %v117 = vpack.c.b16 %v104, %v103
  %v118 = vpack.c.b16 %v106, %v105
  %v119 = vpack.c.b16 %v108, %v107
  %v120 = vpack.c.b16 %v110, %v109
  %v121 = vpack.c.b16 %v112, %v111
  %v122 = vpack.c.b16 %v114, %v113
  %v147 = vunpack.c.l.b16 %v67
  %v148 = vunpack.c.l.b16 %v68
  %v149 = vunpack.c.l.b16 %v69
  %v150 = vunpack.c.l.b16 %v70
  %v151 = vunpack.c.l.b16 %v71
  %v152 = vunpack.c.l.b16 %v72
  %v153 = vunpack.c.l.b16 %v73
  %v154 = vunpack.c.l.b16 %v74
  %v155 = vunpack.c.l.b16 %v75
  %v156 = vunpack.c.l.b16 %v76
  %v157 = vunpack.c.l.b16 %v77
  %v158 = vunpack.c.l.b16 %v78
  %v159 = vunpack.c.l.b16 %v79
  %v160 = vunpack.c.l.b16 %v80
  %v161 = vunpack.c.l.b16 %v81
  %v162 = vunpack.c.l.b16 %v82
  %v163 = vpack.c.b16 %v148, %v147
  %v164 = vpack.c.b16 %v150, %v149
  %v165 = vpack.c.b16 %v152, %v151
  %v166 = vpack.c.b16 %v154, %v153
  %v167 = vpack.c.b16 %v156, %v155
  %v168 = vpack.c.b16 %v158, %v157
  %v169 = vpack.c.b16 %v160, %v159
  %v170 = vpack.c.b16 %v162, %v161
  %179 = vmatprep.subr.bf16.mxu0 0
  %180 = vmatpush1.bf16.msra.mxu0 %v163
  %181 = vmatprep.subr.bf16.mxu0 0
  %182 = vmatpush1.bf16.msra.mxu0 %v164
  %183 = vmatprep.subr.bf16.mxu0 0
  %184 = vmatpush1.bf16.msra.mxu0 %v165
  %185 = vmatprep.subr.bf16.mxu0 0
  %186 = vmatpush1.bf16.msra.mxu0 %v166
  %187 = vmatprep.subr.bf16.mxu0 0
  %188 = vmatpush1.bf16.msra.mxu0 %v167
  %189 = vmatprep.subr.bf16.mxu0 0
  %190 = vmatpush1.bf16.msra.mxu0 %v168
  %191 = vmatprep.subr.bf16.mxu0 0
  %192 = vmatpush1.bf16.msra.mxu0 %v169
  %193 = vmatprep.subr.bf16.mxu0 0
  %194 = vmatpush1.bf16.msra.mxu0 %v170
  %195 = vmatprep.subr.bf16.mxu0 0
  %196 = vmatpush1.bf16.msra.mxu0 0
  %197 = vmatprep.subr.bf16.mxu0 0
  %198 = vmatpush1.bf16.msra.mxu0 0
  %199 = vmatprep.subr.bf16.mxu0 0
  %200 = vmatpush1.bf16.msra.mxu0 0
  %201 = vmatprep.subr.bf16.mxu0 0
  %202 = vmatpush1.bf16.msra.mxu0 0
  %203 = vmatprep.subr.bf16.mxu0 0
  %204 = vmatpush1.bf16.msra.mxu0 0
  %205 = vmatprep.subr.bf16.mxu0 0
  %206 = vmatpush1.bf16.msra.mxu0 0
  %207 = vmatprep.subr.bf16.mxu0 0
  %208 = vmatpush1.bf16.msra.mxu0 0
  %209 = vmatprep.subr.bf16.mxu0 0
  %210 = vmatpush1.bf16.msra.mxu0 0
  %211 = vmatprep.mubr.bf16.mxu0 0
  %212 = vmatmul.mubr.bf16.gmra.mrb[0].mxu0 %v115
  %v213 = vpop.f32.mrb[0].mxu0
  %v214 = vadd.f32 0.0, %v213
  %v215 = vpop.f32.mrb[0].mxu0
  %v216 = vpop.f32.mrb[0].mxu0
  %v217 = vadd.f32 0.0, %v216
  %v218 = vpop.f32.mrb[0].mxu0
  %219 = vmatprep.mubr.bf16.mxu0 0
  %220 = vmatmul.mubr.bf16.gmra.mrb[0].mxu0 %v116
  %v221 = vpop.f32.mrb[0].mxu0
  %v222 = vadd.f32 0.0, %v221
  %v223 = vpop.f32.mrb[0].mxu0
  %v224 = vpop.f32.mrb[0].mxu0
  %v225 = vadd.f32 0.0, %v224
  %v226 = vpop.f32.mrb[0].mxu0
  %227 = vmatprep.mubr.bf16.mxu0 0
  %228 = vmatmul.mubr.bf16.gmra.mrb[0].mxu0 %v117
  %v229 = vpop.f32.mrb[0].mxu0
  %v230 = vadd.f32 0.0, %v229
  %v231 = vpop.f32.mrb[0].mxu0
  %v232 = vpop.f32.mrb[0].mxu0
  %v233 = vadd.f32 0.0, %v232
  %v234 = vpop.f32.mrb[0].mxu0
  %235 = vmatprep.mubr.bf16.mxu0 0
  %236 = vmatmul.mubr.bf16.gmra.mrb[0].mxu0 %v118
  %v237 = vpop.f32.mrb[0].mxu0
  %v238 = vadd.f32 0.0, %v237
  %v239 = vpop.f32.mrb[0].mxu0
  %v240 = vpop.f32.mrb[0].mxu0
  %v241 = vadd.f32 0.0, %v240
  %v242 = vpop.f32.mrb[0].mxu0
  %243 = vmatprep.mubr.bf16.mxu0 0
  %244 = vmatmul.mubr.bf16.gmra.mrb[0].mxu0 %v119
  %v245 = vpop.f32.mrb[0].mxu0
  %v246 = vadd.f32 0.0, %v245
  %v247 = vpop.f32.mrb[0].mxu0
  %v248 = vpop.f32.mrb[0].mxu0
  %v249 = vadd.f32 0.0, %v248
  %v250 = vpop.f32.mrb[0].mxu0
  %251 = vmatprep.mubr.bf16.mxu0 0
  %252 = vmatmul.mubr.bf16.gmra.mrb[0].mxu0 %v120
  %v253 = vpop.f32.mrb[0].mxu0
  %v254 = vadd.f32 0.0, %v253
  %v255 = vpop.f32.mrb[0].mxu0
  %v256 = vpop.f32.mrb[0].mxu0
  %v257 = vadd.f32 0.0, %v256
  %v258 = vpop.f32.mrb[0].mxu0
  %259 = vmatprep.mubr.bf16.mxu0 0
  %260 = vmatmul.mubr.bf16.gmra.mrb[0].mxu0 %v121
  %v261 = vpop.f32.mrb[0].mxu0
  %v262 = vadd.f32 0.0, %v261
  %v263 = vpop.f32.mrb[0].mxu0
  %v264 = vpop.f32.mrb[0].mxu0
  %v265 = vadd.f32 0.0, %v264
  %v266 = vpop.f32.mrb[0].mxu0
  %267 = vmatprep.mubr.bf16.mxu0 0
  %268 = vmatmul.mubr.bf16.gmra.mrb[0].mxu0 %v122
  %v269 = vpop.f32.mrb[0].mxu0
  %v270 = vadd.f32 0.0, %v269
  %v271 = vpop.f32.mrb[0].mxu0
  %v272 = vpop.f32.mrb[0].mxu0
  %v273 = vadd.f32 0.0, %v272
  %v274 = vpop.f32.mrb[0].mxu0
  %275 = vdwg.mxu0
  %v276 = vadd.f32 %v35, %v214
  %v277 = vadd.f32 %v36, %v217
  %v278 = vadd.f32 %v37, %v222
  %v279 = vadd.f32 %v38, %v225
  %v280 = vadd.f32 %v39, %v230
  %v281 = vadd.f32 %v40, %v233
  %v282 = vadd.f32 %v41, %v238
  %v283 = vadd.f32 %v42, %v241
  %v284 = vadd.f32 %v43, %v246
  %v285 = vadd.f32 %v44, %v249
  %v286 = vadd.f32 %v45, %v254
  %v287 = vadd.f32 %v46, %v257
  %v288 = vadd.f32 %v47, %v262
  %v289 = vadd.f32 %v48, %v265
  %v290 = vadd.f32 %v49, %v270
  %v291 = vadd.f32 %v50, %v273
  %292 = vst [vmem:[#allocation2] sm:$0xff] %v276
  %293 = vst [vmem:[#allocation2 + $0x8] sm:$0xff] %v277
  %294 = vst [vmem:[#allocation2 + $0x10] sm:$0xff] %v278
  %295 = vst [vmem:[#allocation2 + $0x18] sm:$0xff] %v279
  %296 = vst [vmem:[#allocation2 + $0x20] sm:$0xff] %v280
  %297 = vst [vmem:[#allocation2 + $0x28] sm:$0xff] %v281
  %298 = vst [vmem:[#allocation2 + $0x30] sm:$0xff] %v282
  %299 = vst [vmem:[#allocation2 + $0x38] sm:$0xff] %v283
  %300 = vst [vmem:[#allocation2 + $0x40] sm:$0xff] %v284
  %301 = vst [vmem:[#allocation2 + $0x48] sm:$0xff] %v285
  %302 = vst [vmem:[#allocation2 + $0x50] sm:$0xff] %v286
  %303 = vst [vmem:[#allocation2 + $0x58] sm:$0xff] %v287
  %304 = vst [vmem:[#allocation2 + $0x60] sm:$0xff] %v288
  %305 = vst [vmem:[#allocation2 + $0x68] sm:$0xff] %v289
  %306 = vst [vmem:[#allocation2 + $0x70] sm:$0xff] %v290
  %307 = vst [vmem:[#allocation2 + $0x78] sm:$0xff] %v291
  // Predicated region
  $region18: #{basic_block_forward.3} parent=0 // pred_check
    %p308 = pneg %p15
  $region19: #{basic_block_forward.3} parent=0 // pred_check_branch
    %310 = sbr.rel (%p308) target = $region21
  $region20: #{basic_block_forward.3} parent=0 // pred_region
    %v311 = vld [vmem:[#allocation2] sm:$0xff]
    %v312 = vld [vmem:[#allocation2 + $0x8] sm:$0xff]
    %v313 = vld [vmem:[#allocation2 + $0x10] sm:$0xff]
    %v314 = vld [vmem:[#allocation2 + $0x18] sm:$0xff]
    %v315 = vld [vmem:[#allocation2 + $0x20] sm:$0xff]
    %v316 = vld [vmem:[#allocation2 + $0x28] sm:$0xff]
    %v317 = vld [vmem:[#allocation2 + $0x30] sm:$0xff]
    %v318 = vld [vmem:[#allocation2 + $0x38] sm:$0xff]
    %v319 = vld [vmem:[#allocation2 + $0x40] sm:$0xff]
    %v320 = vld [vmem:[#allocation2 + $0x48] sm:$0xff]
    %v321 = vld [vmem:[#allocation2 + $0x50] sm:$0xff]
    %v322 = vld [vmem:[#allocation2 + $0x58] sm:$0xff]
    %v323 = vld [vmem:[#allocation2 + $0x60] sm:$0xff]
    %v324 = vld [vmem:[#allocation2 + $0x68] sm:$0xff]
    %v325 = vld [vmem:[#allocation2 + $0x70] sm:$0xff]
    %v326 = vld [vmem:[#allocation2 + $0x78] sm:$0xff]
    %v327 = vld [vmem:[%s2] sm:$0x1]
    %v329 = vlaneseq
    %v330 = vshrl.u32 %v329, 7
    %v331 = vsub.s32 0, %v330
    %v332 = vrot.slane %v327, %v331
    %v334 = vadd.f32 %v311, %v332
    %v335 = vadd.f32 %v312, %v332
    %v336 = vadd.f32 %v313, %v332
    %v337 = vadd.f32 %v314, %v332
    %v338 = vadd.f32 %v315, %v332
    %v339 = vadd.f32 %v316, %v332
    %v340 = vadd.f32 %v317, %v332
    %v341 = vadd.f32 %v318, %v332
    %v342 = vadd.f32 %v319, %v332
    %v343 = vadd.f32 %v320, %v332
    %v344 = vadd.f32 %v321, %v332
    %v345 = vadd.f32 %v322, %v332
    %v346 = vadd.f32 %v323, %v332
    %v347 = vadd.f32 %v324, %v332
    %v348 = vadd.f32 %v325, %v332
    %v349 = vadd.f32 %v326, %v332
    %v350 = vmax.f32 %v334, 0.0
    %v351 = vmax.f32 %v335, 0.0
    %v352 = vmax.f32 %v336, 0.0
    %v353 = vmax.f32 %v337, 0.0
    %v354 = vmax.f32 %v338, 0.0
    %v355 = vmax.f32 %v339, 0.0
    %v356 = vmax.f32 %v340, 0.0
    %v357 = vmax.f32 %v341, 0.0
    %v358 = vmax.f32 %v342, 0.0
    %v359 = vmax.f32 %v343, 0.0
    %v360 = vmax.f32 %v344, 0.0
    %v361 = vmax.f32 %v345, 0.0
    %v362 = vmax.f32 %v346, 0.0
    %v363 = vmax.f32 %v347, 0.0
    %v364 = vmax.f32 %v348, 0.0
    %v365 = vmax.f32 %v349, 0.0
    %v366 = vpack.c.bf16 %v351, %v350
    %v367 = vpack.c.bf16 %v353, %v352
    %v368 = vpack.c.bf16 %v355, %v354
    %v369 = vpack.c.bf16 %v357, %v356
    %v370 = vpack.c.bf16 %v359, %v358
    %v371 = vpack.c.bf16 %v361, %v360
    %v372 = vpack.c.bf16 %v363, %v362
    %v373 = vpack.c.bf16 %v365, %v364
    %v382 = vunpack.c.l.b16 %v366
    %v383 = vunpack.c.h.b16 %v366
    %v384 = vunpack.c.l.b16 %v367
    %v385 = vunpack.c.h.b16 %v367
    %v386 = vunpack.c.l.b16 %v368
    %v387 = vunpack.c.h.b16 %v368
    %v388 = vunpack.c.l.b16 %v369
    %v389 = vunpack.c.h.b16 %v369
    %v390 = vunpack.c.l.b16 %v370
    %v391 = vunpack.c.h.b16 %v370
    %v392 = vunpack.c.l.b16 %v371
    %v393 = vunpack.c.h.b16 %v371
    %v394 = vunpack.c.l.b16 %v372
    %v395 = vunpack.c.h.b16 %v372
    %v396 = vunpack.c.l.b16 %v373
    %v397 = vunpack.c.h.b16 %v373
    %v398 = vpack.c.b16 %v382, %v382
    %v399 = vpack.c.b16 %v383, %v383
    %v400 = vpack.c.b16 %v384, %v384
    %v401 = vpack.c.b16 %v385, %v385
    %v402 = vpack.c.b16 %v386, %v386
    %v403 = vpack.c.b16 %v387, %v387
    %v404 = vpack.c.b16 %v388, %v388
    %v405 = vpack.c.b16 %v389, %v389
    %v406 = vpack.c.b16 %v390, %v390
    %v407 = vpack.c.b16 %v391, %v391
    %v408 = vpack.c.b16 %v392, %v392
    %v409 = vpack.c.b16 %v393, %v393
    %v410 = vpack.c.b16 %v394, %v394
    %v411 = vpack.c.b16 %v395, %v395
    %v412 = vpack.c.b16 %v396, %v396
    %v413 = vpack.c.b16 %v397, %v397
    %430 = vst [vmem:[%s3] sm:$0xf] %v398
    %431 = vst [vmem:[%s3 + $0x4] sm:$0xf] %v399
    %432 = vst [vmem:[%s3 + $0x8] sm:$0xf] %v400
    %433 = vst [vmem:[%s3 + $0xc] sm:$0xf] %v401
    %434 = vst [vmem:[%s3 + $0x10] sm:$0xf] %v402
    %435 = vst [vmem:[%s3 + $0x14] sm:$0xf] %v403
    %436 = vst [vmem:[%s3 + $0x18] sm:$0xf] %v404
    %437 = vst [vmem:[%s3 + $0x1c] sm:$0xf] %v405
    %438 = vst [vmem:[%s3 + $0x20] sm:$0xf] %v406
    %439 = vst [vmem:[%s3 + $0x24] sm:$0xf] %v407
    %440 = vst [vmem:[%s3 + $0x28] sm:$0xf] %v408
    %441 = vst [vmem:[%s3 + $0x2c] sm:$0xf] %v409
    %442 = vst [vmem:[%s3 + $0x30] sm:$0xf] %v410
    %443 = vst [vmem:[%s3 + $0x34] sm:$0xf] %v411
    %444 = vst [vmem:[%s3 + $0x38] sm:$0xf] %v412
    %445 = vst [vmem:[%s3 + $0x3c] sm:$0xf] %v413
  $region21: #{basic_block_forward.3} parent=0 // pred_fallthru
    _
  // Predicated region
  $region22: #{basic_block_forward.3} parent=0 // pred_check
    _
  $region23: #{basic_block_forward.3} parent=0 // pred_check_branch
    %447 = sbr.rel (0) target = $region25
  $region24: #{basic_block_forward.3} parent=0 // pred_region
    _
  $region25: #{basic_block_forward.3} parent=0 // pred_fallthru
    _
  // Predicated region
  $region26: #{basic_block_forward.3} parent=0 // pred_check
    _
  $region27: #{basic_block_forward.3} parent=0 // pred_check_branch
    %449 = sbr.rel (0) target = $region29
  $region28: #{basic_block_forward.3} parent=0 // pred_region
    _
  $region29: #{basic_block_forward.3} parent=0 // pred_fallthru
    _

// kernel: basic_block_forward.4
$region0: #{basic_block_forward.4}
  #allocation0 [shape = 'u32[]', space=smem, size = 0x4, offset = 0x4, fixed_abs, tag = 'smem constant byte address 0x4 - core index']
  #allocation1 [shape = 'u32[144,128]{1,0:T(1,128)}', space=vmem, size = 0x12000, scoped, tag = 'internal scratch']
  #allocation2 [shape = 'f32[128,128]{1,0:T(8,128)}', space=vmem, size = 0x10000, scoped, tag = 'scratch operand']
  %s0 = inlined_call_operand.vmem [shape: bf16[128,128], index: 0, kind: input, shape index: {}]
  %s1 = inlined_call_operand.vmem [shape: bf16[128,128], index: 1, kind: input, shape index: {}]
  %s2 = inlined_call_operand.vmem [shape: f32[1,128], index: 2, kind: input, shape index: {}]
  %s3 = inlined_call_operand.vmem [shape: bf16[128,128], index: 3, kind: output, shape index: {}]
  %s4 = sld [smem:[#allocation0]]
  $region30: #{basic_block_forward.4} parent=0
    _
  %s6 = ssub.s32 1, %s4
  %s7 = scalar_select 0, %s6, %s4
  // Predicated region
  $region2: #{basic_block_forward.4} parent=0 // pred_check
    _
  $region3: #{basic_block_forward.4} parent=0 // pred_check_branch
    %9 = sbr.rel (0) target = $region5
  $region4: #{basic_block_forward.4} parent=0 // pred_region
    _
  $region5: #{basic_block_forward.4} parent=0 // pred_fallthru
    _
  // Predicated region
  $region6: #{basic_block_forward.4} parent=0 // pred_check
    _
  $region7: #{basic_block_forward.4} parent=0 // pred_check_branch
    %11 = sbr.rel (0) target = $region9
  $region8: #{basic_block_forward.4} parent=0 // pred_region
    _
  $region9: #{basic_block_forward.4} parent=0 // pred_fallthru
    _
  // Predicated region
  $region10: #{basic_block_forward.4} parent=0 // pred_check
    _
  $region11: #{basic_block_forward.4} parent=0 // pred_check_branch
    %13 = sbr.rel (0) target = $region13
  $region12: #{basic_block_forward.4} parent=0 // pred_region
    _
  $region13: #{basic_block_forward.4} parent=0 // pred_fallthru
    _
  %p15 = scmp.eq.s32.totalorder 0, 0
  // Predicated region
  $region14: #{basic_block_forward.4} parent=0 // pred_check
    %p16 = pneg %p15
  $region15: #{basic_block_forward.4} parent=0 // pred_check_branch
    %18 = sbr.rel (%p16) target = $region17
  $region16: #{basic_block_forward.4} parent=0 // pred_region
    %19 = vst [vmem:[#allocation2] sm:$0xff] 0.0
    %20 = vst [vmem:[#allocation2 + $0x8] sm:$0xff] 0.0
    %21 = vst [vmem:[#allocation2 + $0x10] sm:$0xff] 0.0
    %22 = vst [vmem:[#allocation2 + $0x18] sm:$0xff] 0.0
    %23 = vst [vmem:[#allocation2 + $0x20] sm:$0xff] 0.0
    %24 = vst [vmem:[#allocation2 + $0x28] sm:$0xff] 0.0
    %25 = vst [vmem:[#allocation2 + $0x30] sm:$0xff] 0.0
    %26 = vst [vmem:[#allocation2 + $0x38] sm:$0xff] 0.0
    %27 = vst [vmem:[#allocation2 + $0x40] sm:$0xff] 0.0
    %28 = vst [vmem:[#allocation2 + $0x48] sm:$0xff] 0.0
    %29 = vst [vmem:[#allocation2 + $0x50] sm:$0xff] 0.0
    %30 = vst [vmem:[#allocation2 + $0x58] sm:$0xff] 0.0
    %31 = vst [vmem:[#allocation2 + $0x60] sm:$0xff] 0.0
    %32 = vst [vmem:[#allocation2 + $0x68] sm:$0xff] 0.0
    %33 = vst [vmem:[#allocation2 + $0x70] sm:$0xff] 0.0
    %34 = vst [vmem:[#allocation2 + $0x78] sm:$0xff] 0.0
  $region17: #{basic_block_forward.4} parent=0 // pred_fallthru
    _
  %v35 = vld [vmem:[#allocation2] sm:$0xff]
  %v36 = vld [vmem:[#allocation2 + $0x8] sm:$0xff]
  %v37 = vld [vmem:[#allocation2 + $0x10] sm:$0xff]
  %v38 = vld [vmem:[#allocation2 + $0x18] sm:$0xff]
  %v39 = vld [vmem:[#allocation2 + $0x20] sm:$0xff]
  %v40 = vld [vmem:[#allocation2 + $0x28] sm:$0xff]
  %v41 = vld [vmem:[#allocation2 + $0x30] sm:$0xff]
  %v42 = vld [vmem:[#allocation2 + $0x38] sm:$0xff]
  %v43 = vld [vmem:[#allocation2 + $0x40] sm:$0xff]
  %v44 = vld [vmem:[#allocation2 + $0x48] sm:$0xff]
  %v45 = vld [vmem:[#allocation2 + $0x50] sm:$0xff]
  %v46 = vld [vmem:[#allocation2 + $0x58] sm:$0xff]
  %v47 = vld [vmem:[#allocation2 + $0x60] sm:$0xff]
  %v48 = vld [vmem:[#allocation2 + $0x68] sm:$0xff]
  %v49 = vld [vmem:[#allocation2 + $0x70] sm:$0xff]
  %v50 = vld [vmem:[#allocation2 + $0x78] sm:$0xff]
  %v51 = vld [vmem:[%s0] sm:$0xf]
  %v52 = vld [vmem:[%s0 + $0x4] sm:$0xf]
  %v53 = vld [vmem:[%s0 + $0x8] sm:$0xf]
  %v54 = vld [vmem:[%s0 + $0xc] sm:$0xf]
  %v55 = vld [vmem:[%s0 + $0x10] sm:$0xf]
  %v56 = vld [vmem:[%s0 + $0x14] sm:$0xf]
  %v57 = vld [vmem:[%s0 + $0x18] sm:$0xf]
  %v58 = vld [vmem:[%s0 + $0x1c] sm:$0xf]
  %v59 = vld [vmem:[%s0 + $0x20] sm:$0xf]
  %v60 = vld [vmem:[%s0 + $0x24] sm:$0xf]
  %v61 = vld [vmem:[%s0 + $0x28] sm:$0xf]
  %v62 = vld [vmem:[%s0 + $0x2c] sm:$0xf]
  %v63 = vld [vmem:[%s0 + $0x30] sm:$0xf]
  %v64 = vld [vmem:[%s0 + $0x34] sm:$0xf]
  %v65 = vld [vmem:[%s0 + $0x38] sm:$0xf]
  %v66 = vld [vmem:[%s0 + $0x3c] sm:$0xf]
  %v67 = vld [vmem:[%s1] sm:$0xf]
  %v68 = vld [vmem:[%s1 + $0x4] sm:$0xf]
  %v69 = vld [vmem:[%s1 + $0x8] sm:$0xf]
  %v70 = vld [vmem:[%s1 + $0xc] sm:$0xf]
  %v71 = vld [vmem:[%s1 + $0x10] sm:$0xf]
  %v72 = vld [vmem:[%s1 + $0x14] sm:$0xf]
  %v73 = vld [vmem:[%s1 + $0x18] sm:$0xf]
  %v74 = vld [vmem:[%s1 + $0x1c] sm:$0xf]
  %v75 = vld [vmem:[%s1 + $0x20] sm:$0xf]
  %v76 = vld [vmem:[%s1 + $0x24] sm:$0xf]
  %v77 = vld [vmem:[%s1 + $0x28] sm:$0xf]
  %v78 = vld [vmem:[%s1 + $0x2c] sm:$0xf]
  %v79 = vld [vmem:[%s1 + $0x30] sm:$0xf]
  %v80 = vld [vmem:[%s1 + $0x34] sm:$0xf]
  %v81 = vld [vmem:[%s1 + $0x38] sm:$0xf]
  %v82 = vld [vmem:[%s1 + $0x3c] sm:$0xf]
  %v99 = vunpack.c.l.b16 %v51
  %v100 = vunpack.c.l.b16 %v52
  %v101 = vunpack.c.l.b16 %v53
  %v102 = vunpack.c.l.b16 %v54
  %v103 = vunpack.c.l.b16 %v55
  %v104 = vunpack.c.l.b16 %v56
  %v105 = vunpack.c.l.b16 %v57
  %v106 = vunpack.c.l.b16 %v58
  %v107 = vunpack.c.l.b16 %v59
  %v108 = vunpack.c.l.b16 %v60
  %v109 = vunpack.c.l.b16 %v61
  %v110 = vunpack.c.l.b16 %v62
  %v111 = vunpack.c.l.b16 %v63
  %v112 = vunpack.c.l.b16 %v64
  %v113 = vunpack.c.l.b16 %v65
  %v114 = vunpack.c.l.b16 %v66
  %v115 = vpack.c.b16 %v100, %v99
  %v116 = vpack.c.b16 %v102, %v101
  %v117 = vpack.c.b16 %v104, %v103
  %v118 = vpack.c.b16 %v106, %v105
  %v119 = vpack.c.b16 %v108, %v107
  %v120 = vpack.c.b16 %v110, %v109
  %v121 = vpack.c.b16 %v112, %v111
  %v122 = vpack.c.b16 %v114, %v113
  %v147 = vunpack.c.l.b16 %v67
  %v148 = vunpack.c.l.b16 %v68
  %v149 = vunpack.c.l.b16 %v69
  %v150 = vunpack.c.l.b16 %v70
  %v151 = vunpack.c.l.b16 %v71
  %v152 = vunpack.c.l.b16 %v72
  %v153 = vunpack.c.l.b16 %v73
  %v154 = vunpack.c.l.b16 %v74
  %v155 = vunpack.c.l.b16 %v75
  %v156 = vunpack.c.l.b16 %v76
  %v157 = vunpack.c.l.b16 %v77
  %v158 = vunpack.c.l.b16 %v78
  %v159 = vunpack.c.l.b16 %v79
  %v160 = vunpack.c.l.b16 %v80
  %v161 = vunpack.c.l.b16 %v81
  %v162 = vunpack.c.l.b16 %v82
  %v163 = vpack.c.b16 %v148, %v147
  %v164 = vpack.c.b16 %v150, %v149
  %v165 = vpack.c.b16 %v152, %v151
  %v166 = vpack.c.b16 %v154, %v153
  %v167 = vpack.c.b16 %v156, %v155
  %v168 = vpack.c.b16 %v158, %v157
  %v169 = vpack.c.b16 %v160, %v159
  %v170 = vpack.c.b16 %v162, %v161
  %179 = vmatprep.subr.bf16.mxu0 0
  %180 = vmatpush1.bf16.msra.mxu0 %v163
  %181 = vmatprep.subr.bf16.mxu0 0
  %182 = vmatpush1.bf16.msra.mxu0 %v164
  %183 = vmatprep.subr.bf16.mxu0 0
  %184 = vmatpush1.bf16.msra.mxu0 %v165
  %185 = vmatprep.subr.bf16.mxu0 0
  %186 = vmatpush1.bf16.msra.mxu0 %v166
  %187 = vmatprep.subr.bf16.mxu0 0
  %188 = vmatpush1.bf16.msra.mxu0 %v167
  %189 = vmatprep.subr.bf16.mxu0 0
  %190 = vmatpush1.bf16.msra.mxu0 %v168
  %191 = vmatprep.subr.bf16.mxu0 0
  %192 = vmatpush1.bf16.msra.mxu0 %v169
  %193 = vmatprep.subr.bf16.mxu0 0
  %194 = vmatpush1.bf16.msra.mxu0 %v170
  %195 = vmatprep.subr.bf16.mxu0 0
  %196 = vmatpush1.bf16.msra.mxu0 0
  %197 = vmatprep.subr.bf16.mxu0 0
  %198 = vmatpush1.bf16.msra.mxu0 0
  %199 = vmatprep.subr.bf16.mxu0 0
  %200 = vmatpush1.bf16.msra.mxu0 0
  %201 = vmatprep.subr.bf16.mxu0 0
  %202 = vmatpush1.bf16.msra.mxu0 0
  %203 = vmatprep.subr.bf16.mxu0 0
  %204 = vmatpush1.bf16.msra.mxu0 0
  %205 = vmatprep.subr.bf16.mxu0 0
  %206 = vmatpush1.bf16.msra.mxu0 0
  %207 = vmatprep.subr.bf16.mxu0 0
  %208 = vmatpush1.bf16.msra.mxu0 0
  %209 = vmatprep.subr.bf16.mxu0 0
  %210 = vmatpush1.bf16.msra.mxu0 0
  %211 = vmatprep.mubr.bf16.mxu0 0
  %212 = vmatmul.mubr.bf16.gmra.mrb[0].mxu0 %v115
  %v213 = vpop.f32.mrb[0].mxu0
  %v214 = vadd.f32 0.0, %v213
  %v215 = vpop.f32.mrb[0].mxu0
  %v216 = vpop.f32.mrb[0].mxu0
  %v217 = vadd.f32 0.0, %v216
  %v218 = vpop.f32.mrb[0].mxu0
  %219 = vmatprep.mubr.bf16.mxu0 0
  %220 = vmatmul.mubr.bf16.gmra.mrb[0].mxu0 %v116
  %v221 = vpop.f32.mrb[0].mxu0
  %v222 = vadd.f32 0.0, %v221
  %v223 = vpop.f32.mrb[0].mxu0
  %v224 = vpop.f32.mrb[0].mxu0
  %v225 = vadd.f32 0.0, %v224
  %v226 = vpop.f32.mrb[0].mxu0
  %227 = vmatprep.mubr.bf16.mxu0 0
  %228 = vmatmul.mubr.bf16.gmra.mrb[0].mxu0 %v117
  %v229 = vpop.f32.mrb[0].mxu0
  %v230 = vadd.f32 0.0, %v229
  %v231 = vpop.f32.mrb[0].mxu0
  %v232 = vpop.f32.mrb[0].mxu0
  %v233 = vadd.f32 0.0, %v232
  %v234 = vpop.f32.mrb[0].mxu0
  %235 = vmatprep.mubr.bf16.mxu0 0
  %236 = vmatmul.mubr.bf16.gmra.mrb[0].mxu0 %v118
  %v237 = vpop.f32.mrb[0].mxu0
  %v238 = vadd.f32 0.0, %v237
  %v239 = vpop.f32.mrb[0].mxu0
  %v240 = vpop.f32.mrb[0].mxu0
  %v241 = vadd.f32 0.0, %v240
  %v242 = vpop.f32.mrb[0].mxu0
  %243 = vmatprep.mubr.bf16.mxu0 0
  %244 = vmatmul.mubr.bf16.gmra.mrb[0].mxu0 %v119
  %v245 = vpop.f32.mrb[0].mxu0
  %v246 = vadd.f32 0.0, %v245
  %v247 = vpop.f32.mrb[0].mxu0
  %v248 = vpop.f32.mrb[0].mxu0
  %v249 = vadd.f32 0.0, %v248
  %v250 = vpop.f32.mrb[0].mxu0
  %251 = vmatprep.mubr.bf16.mxu0 0
  %252 = vmatmul.mubr.bf16.gmra.mrb[0].mxu0 %v120
  %v253 = vpop.f32.mrb[0].mxu0
  %v254 = vadd.f32 0.0, %v253
  %v255 = vpop.f32.mrb[0].mxu0
  %v256 = vpop.f32.mrb[0].mxu0
  %v257 = vadd.f32 0.0, %v256
  %v258 = vpop.f32.mrb[0].mxu0
  %259 = vmatprep.mubr.bf16.mxu0 0
  %260 = vmatmul.mubr.bf16.gmra.mrb[0].mxu0 %v121
  %v261 = vpop.f32.mrb[0].mxu0
  %v262 = vadd.f32 0.0, %v261
  %v263 = vpop.f32.mrb[0].mxu0
  %v264 = vpop.f32.mrb[0].mxu0
  %v265 = vadd.f32 0.0, %v264
  %v266 = vpop.f32.mrb[0].mxu0
  %267 = vmatprep.mubr.bf16.mxu0 0
  %268 = vmatmul.mubr.bf16.gmra.mrb[0].mxu0 %v122
  %v269 = vpop.f32.mrb[0].mxu0
  %v270 = vadd.f32 0.0, %v269
  %v271 = vpop.f32.mrb[0].mxu0
  %v272 = vpop.f32.mrb[0].mxu0
  %v273 = vadd.f32 0.0, %v272
  %v274 = vpop.f32.mrb[0].mxu0
  %275 = vdwg.mxu0
  %v276 = vadd.f32 %v35, %v214
  %v277 = vadd.f32 %v36, %v217
  %v278 = vadd.f32 %v37, %v222
  %v279 = vadd.f32 %v38, %v225
  %v280 = vadd.f32 %v39, %v230
  %v281 = vadd.f32 %v40, %v233
  %v282 = vadd.f32 %v41, %v238
  %v283 = vadd.f32 %v42, %v241
  %v284 = vadd.f32 %v43, %v246
  %v285 = vadd.f32 %v44, %v249
  %v286 = vadd.f32 %v45, %v254
  %v287 = vadd.f32 %v46, %v257
  %v288 = vadd.f32 %v47, %v262
  %v289 = vadd.f32 %v48, %v265
  %v290 = vadd.f32 %v49, %v270
  %v291 = vadd.f32 %v50, %v273
  %292 = vst [vmem:[#allocation2] sm:$0xff] %v276
  %293 = vst [vmem:[#allocation2 + $0x8] sm:$0xff] %v277
  %294 = vst [vmem:[#allocation2 + $0x10] sm:$0xff] %v278
  %295 = vst [vmem:[#allocation2 + $0x18] sm:$0xff] %v279
  %296 = vst [vmem:[#allocation2 + $0x20] sm:$0xff] %v280
  %297 = vst [vmem:[#allocation2 + $0x28] sm:$0xff] %v281
  %298 = vst [vmem:[#allocation2 + $0x30] sm:$0xff] %v282
  %299 = vst [vmem:[#allocation2 + $0x38] sm:$0xff] %v283
  %300 = vst [vmem:[#allocation2 + $0x40] sm:$0xff] %v284
  %301 = vst [vmem:[#allocation2 + $0x48] sm:$0xff] %v285
  %302 = vst [vmem:[#allocation2 + $0x50] sm:$0xff] %v286
  %303 = vst [vmem:[#allocation2 + $0x58] sm:$0xff] %v287
  %304 = vst [vmem:[#allocation2 + $0x60] sm:$0xff] %v288
  %305 = vst [vmem:[#allocation2 + $0x68] sm:$0xff] %v289
  %306 = vst [vmem:[#allocation2 + $0x70] sm:$0xff] %v290
  %307 = vst [vmem:[#allocation2 + $0x78] sm:$0xff] %v291
  // Predicated region
  $region18: #{basic_block_forward.4} parent=0 // pred_check
    %p308 = pneg %p15
  $region19: #{basic_block_forward.4} parent=0 // pred_check_branch
    %310 = sbr.rel (%p308) target = $region21
  $region20: #{basic_block_forward.4} parent=0 // pred_region
    %v311 = vld [vmem:[#allocation2] sm:$0xff]
    %v312 = vld [vmem:[#allocation2 + $0x8] sm:$0xff]
    %v313 = vld [vmem:[#allocation2 + $0x10] sm:$0xff]
    %v314 = vld [vmem:[#allocation2 + $0x18] sm:$0xff]
    %v315 = vld [vmem:[#allocation2 + $0x20] sm:$0xff]
    %v316 = vld [vmem:[#allocation2 + $0x28] sm:$0xff]
    %v317 = vld [vmem:[#allocation2 + $0x30] sm:$0xff]
    %v318 = vld [vmem:[#allocation2 + $0x38] sm:$0xff]
    %v319 = vld [vmem:[#allocation2 + $0x40] sm:$0xff]
    %v320 = vld [vmem:[#allocation2 + $0x48] sm:$0xff]
    %v321 = vld [vmem:[#allocation2 + $0x50] sm:$0xff]
    %v322 = vld [vmem:[#allocation2 + $0x58] sm:$0xff]
    %v323 = vld [vmem:[#allocation2 + $0x60] sm:$0xff]
    %v324 = vld [vmem:[#allocation2 + $0x68] sm:$0xff]
    %v325 = vld [vmem:[#allocation2 + $0x70] sm:$0xff]
    %v326 = vld [vmem:[#allocation2 + $0x78] sm:$0xff]
    %v327 = vld [vmem:[%s2] sm:$0x1]
    %v329 = vlaneseq
    %v330 = vshrl.u32 %v329, 7
    %v331 = vsub.s32 0, %v330
    %v332 = vrot.slane %v327, %v331
    %v334 = vadd.f32 %v311, %v332
    %v335 = vadd.f32 %v312, %v332
    %v336 = vadd.f32 %v313, %v332
    %v337 = vadd.f32 %v314, %v332
    %v338 = vadd.f32 %v315, %v332
    %v339 = vadd.f32 %v316, %v332
    %v340 = vadd.f32 %v317, %v332
    %v341 = vadd.f32 %v318, %v332
    %v342 = vadd.f32 %v319, %v332
    %v343 = vadd.f32 %v320, %v332
    %v344 = vadd.f32 %v321, %v332
    %v345 = vadd.f32 %v322, %v332
    %v346 = vadd.f32 %v323, %v332
    %v347 = vadd.f32 %v324, %v332
    %v348 = vadd.f32 %v325, %v332
    %v349 = vadd.f32 %v326, %v332
    %v350 = vpack.c.bf16 %v335, %v334
    %v351 = vpack.c.bf16 %v337, %v336
    %v352 = vpack.c.bf16 %v339, %v338
    %v353 = vpack.c.bf16 %v341, %v340
    %v354 = vpack.c.bf16 %v343, %v342
    %v355 = vpack.c.bf16 %v345, %v344
    %v356 = vpack.c.bf16 %v347, %v346
    %v357 = vpack.c.bf16 %v349, %v348
    %v366 = vunpack.c.l.b16 %v350
    %v367 = vunpack.c.h.b16 %v350
    %v368 = vunpack.c.l.b16 %v351
    %v369 = vunpack.c.h.b16 %v351
    %v370 = vunpack.c.l.b16 %v352
    %v371 = vunpack.c.h.b16 %v352
    %v372 = vunpack.c.l.b16 %v353
    %v373 = vunpack.c.h.b16 %v353
    %v374 = vunpack.c.l.b16 %v354
    %v375 = vunpack.c.h.b16 %v354
    %v376 = vunpack.c.l.b16 %v355
    %v377 = vunpack.c.h.b16 %v355
    %v378 = vunpack.c.l.b16 %v356
    %v379 = vunpack.c.h.b16 %v356
    %v380 = vunpack.c.l.b16 %v357
    %v381 = vunpack.c.h.b16 %v357
    %v382 = vpack.c.b16 %v366, %v366
    %v383 = vpack.c.b16 %v367, %v367
    %v384 = vpack.c.b16 %v368, %v368
    %v385 = vpack.c.b16 %v369, %v369
    %v386 = vpack.c.b16 %v370, %v370
    %v387 = vpack.c.b16 %v371, %v371
    %v388 = vpack.c.b16 %v372, %v372
    %v389 = vpack.c.b16 %v373, %v373
    %v390 = vpack.c.b16 %v374, %v374
    %v391 = vpack.c.b16 %v375, %v375
    %v392 = vpack.c.b16 %v376, %v376
    %v393 = vpack.c.b16 %v377, %v377
    %v394 = vpack.c.b16 %v378, %v378
    %v395 = vpack.c.b16 %v379, %v379
    %v396 = vpack.c.b16 %v380, %v380
    %v397 = vpack.c.b16 %v381, %v381
    %414 = vst [vmem:[%s3] sm:$0xf] %v382
    %415 = vst [vmem:[%s3 + $0x4] sm:$0xf] %v383
    %416 = vst [vmem:[%s3 + $0x8] sm:$0xf] %v384
    %417 = vst [vmem:[%s3 + $0xc] sm:$0xf] %v385
    %418 = vst [vmem:[%s3 + $0x10] sm:$0xf] %v386
    %419 = vst [vmem:[%s3 + $0x14] sm:$0xf] %v387
    %420 = vst [vmem:[%s3 + $0x18] sm:$0xf] %v388
    %421 = vst [vmem:[%s3 + $0x1c] sm:$0xf] %v389
    %422 = vst [vmem:[%s3 + $0x20] sm:$0xf] %v390
    %423 = vst [vmem:[%s3 + $0x24] sm:$0xf] %v391
    %424 = vst [vmem:[%s3 + $0x28] sm:$0xf] %v392
    %425 = vst [vmem:[%s3 + $0x2c] sm:$0xf] %v393
    %426 = vst [vmem:[%s3 + $0x30] sm:$0xf] %v394
    %427 = vst [vmem:[%s3 + $0x34] sm:$0xf] %v395
    %428 = vst [vmem:[%s3 + $0x38] sm:$0xf] %v396
    %429 = vst [vmem:[%s3 + $0x3c] sm:$0xf] %v397
  $region21: #{basic_block_forward.4} parent=0 // pred_fallthru
    _
  // Predicated region
  $region22: #{basic_block_forward.4} parent=0 // pred_check
    _
  $region23: #{basic_block_forward.4} parent=0 // pred_check_branch
    %431 = sbr.rel (0) target = $region25
  $region24: #{basic_block_forward.4} parent=0 // pred_region
    _
  $region25: #{basic_block_forward.4} parent=0 // pred_fallthru
    _
  // Predicated region
  $region26: #{basic_block_forward.4} parent=0 // pred_check
    _
  $region27: #{basic_block_forward.4} parent=0 // pred_check_branch
    %433 = sbr.rel (0) target = $region29
  $region28: #{basic_block_forward.4} parent=0 // pred_region
    _
  $region29: #{basic_block_forward.4} parent=0 // pred_fallthru
    _

// kernel: basic_block_forward.5
$region0: #{basic_block_forward.5}
  #allocation0 [shape = 'u32[]', space=smem, size = 0x4, offset = 0x4, fixed_abs, tag = 'smem constant byte address 0x4 - core index']
  #allocation1 [shape = 'u32[144,128]{1,0:T(1,128)}', space=vmem, size = 0x12000, scoped, tag = 'internal scratch']
  #allocation2 [shape = 'f32[128,128]{1,0:T(8,128)}', space=vmem, size = 0x10000, scoped, tag = 'scratch operand']
  %s0 = inlined_call_operand.vmem [shape: bf16[128,128], index: 0, kind: input, shape index: {}]
  %s1 = inlined_call_operand.vmem [shape: bf16[128,128], index: 1, kind: input, shape index: {}]
  %s2 = inlined_call_operand.vmem [shape: f32[1,128], index: 2, kind: input, shape index: {}]
  %s3 = inlined_call_operand.vmem [shape: bf16[128,128], index: 3, kind: input, shape index: {}]
  %s4 = inlined_call_operand.vmem [shape: f32[128,128], index: 4, kind: output, shape index: {}]
  %s5 = sld [smem:[#allocation0]]
  $region34: #{basic_block_forward.5} parent=0
    _
  %s7 = ssub.s32 1, %s5
  %s8 = scalar_select 0, %s7, %s5
  // Predicated region
  $region2: #{basic_block_forward.5} parent=0 // pred_check
    _
  $region3: #{basic_block_forward.5} parent=0 // pred_check_branch
    %10 = sbr.rel (0) target = $region5
  $region4: #{basic_block_forward.5} parent=0 // pred_region
    _
  $region5: #{basic_block_forward.5} parent=0 // pred_fallthru
    _
  // Predicated region
  $region6: #{basic_block_forward.5} parent=0 // pred_check
    _
  $region7: #{basic_block_forward.5} parent=0 // pred_check_branch
    %12 = sbr.rel (0) target = $region9
  $region8: #{basic_block_forward.5} parent=0 // pred_region
    _
  $region9: #{basic_block_forward.5} parent=0 // pred_fallthru
    _
  // Predicated region
  $region10: #{basic_block_forward.5} parent=0 // pred_check
    _
  $region11: #{basic_block_forward.5} parent=0 // pred_check_branch
    %14 = sbr.rel (0) target = $region13
  $region12: #{basic_block_forward.5} parent=0 // pred_region
    _
  $region13: #{basic_block_forward.5} parent=0 // pred_fallthru
    _
  // Predicated region
  $region14: #{basic_block_forward.5} parent=0 // pred_check
    _
  $region15: #{basic_block_forward.5} parent=0 // pred_check_branch
    %16 = sbr.rel (0) target = $region17
  $region16: #{basic_block_forward.5} parent=0 // pred_region
    _
  $region17: #{basic_block_forward.5} parent=0 // pred_fallthru
    _
  %p18 = scmp.eq.s32.totalorder 0, 0
  // Predicated region
  $region18: #{basic_block_forward.5} parent=0 // pred_check
    %p19 = pneg %p18
  $region19: #{basic_block_forward.5} parent=0 // pred_check_branch
    %21 = sbr.rel (%p19) target = $region21
  $region20: #{basic_block_forward.5} parent=0 // pred_region
    %22 = vst [vmem:[#allocation2] sm:$0xff] 0.0
    %23 = vst [vmem:[#allocation2 + $0x8] sm:$0xff] 0.0
    %24 = vst [vmem:[#allocation2 + $0x10] sm:$0xff] 0.0
    %25 = vst [vmem:[#allocation2 + $0x18] sm:$0xff] 0.0
    %26 = vst [vmem:[#allocation2 + $0x20] sm:$0xff] 0.0
    %27 = vst [vmem:[#allocation2 + $0x28] sm:$0xff] 0.0
    %28 = vst [vmem:[#allocation2 + $0x30] sm:$0xff] 0.0
    %29 = vst [vmem:[#allocation2 + $0x38] sm:$0xff] 0.0
    %30 = vst [vmem:[#allocation2 + $0x40] sm:$0xff] 0.0
    %31 = vst [vmem:[#allocation2 + $0x48] sm:$0xff] 0.0
    %32 = vst [vmem:[#allocation2 + $0x50] sm:$0xff] 0.0
    %33 = vst [vmem:[#allocation2 + $0x58] sm:$0xff] 0.0
    %34 = vst [vmem:[#allocation2 + $0x60] sm:$0xff] 0.0
    %35 = vst [vmem:[#allocation2 + $0x68] sm:$0xff] 0.0
    %36 = vst [vmem:[#allocation2 + $0x70] sm:$0xff] 0.0
    %37 = vst [vmem:[#allocation2 + $0x78] sm:$0xff] 0.0
  $region21: #{basic_block_forward.5} parent=0 // pred_fallthru
    _
  %v38 = vld [vmem:[#allocation2] sm:$0xff]
  %v39 = vld [vmem:[#allocation2 + $0x8] sm:$0xff]
  %v40 = vld [vmem:[#allocation2 + $0x10] sm:$0xff]
  %v41 = vld [vmem:[#allocation2 + $0x18] sm:$0xff]
  %v42 = vld [vmem:[#allocation2 + $0x20] sm:$0xff]
  %v43 = vld [vmem:[#allocation2 + $0x28] sm:$0xff]
  %v44 = vld [vmem:[#allocation2 + $0x30] sm:$0xff]
  %v45 = vld [vmem:[#allocation2 + $0x38] sm:$0xff]
  %v46 = vld [vmem:[#allocation2 + $0x40] sm:$0xff]
  %v47 = vld [vmem:[#allocation2 + $0x48] sm:$0xff]
  %v48 = vld [vmem:[#allocation2 + $0x50] sm:$0xff]
  %v49 = vld [vmem:[#allocation2 + $0x58] sm:$0xff]
  %v50 = vld [vmem:[#allocation2 + $0x60] sm:$0xff]
  %v51 = vld [vmem:[#allocation2 + $0x68] sm:$0xff]
  %v52 = vld [vmem:[#allocation2 + $0x70] sm:$0xff]
  %v53 = vld [vmem:[#allocation2 + $0x78] sm:$0xff]
  %v54 = vld [vmem:[%s0] sm:$0xf]
  %v55 = vld [vmem:[%s0 + $0x4] sm:$0xf]
  %v56 = vld [vmem:[%s0 + $0x8] sm:$0xf]
  %v57 = vld [vmem:[%s0 + $0xc] sm:$0xf]
  %v58 = vld [vmem:[%s0 + $0x10] sm:$0xf]
  %v59 = vld [vmem:[%s0 + $0x14] sm:$0xf]
  %v60 = vld [vmem:[%s0 + $0x18] sm:$0xf]
  %v61 = vld [vmem:[%s0 + $0x1c] sm:$0xf]
  %v62 = vld [vmem:[%s0 + $0x20] sm:$0xf]
  %v63 = vld [vmem:[%s0 + $0x24] sm:$0xf]
  %v64 = vld [vmem:[%s0 + $0x28] sm:$0xf]
  %v65 = vld [vmem:[%s0 + $0x2c] sm:$0xf]
  %v66 = vld [vmem:[%s0 + $0x30] sm:$0xf]
  %v67 = vld [vmem:[%s0 + $0x34] sm:$0xf]
  %v68 = vld [vmem:[%s0 + $0x38] sm:$0xf]
  %v69 = vld [vmem:[%s0 + $0x3c] sm:$0xf]
  %v70 = vld [vmem:[%s1] sm:$0xf]
  %v71 = vld [vmem:[%s1 + $0x4] sm:$0xf]
  %v72 = vld [vmem:[%s1 + $0x8] sm:$0xf]
  %v73 = vld [vmem:[%s1 + $0xc] sm:$0xf]
  %v74 = vld [vmem:[%s1 + $0x10] sm:$0xf]
  %v75 = vld [vmem:[%s1 + $0x14] sm:$0xf]
  %v76 = vld [vmem:[%s1 + $0x18] sm:$0xf]
  %v77 = vld [vmem:[%s1 + $0x1c] sm:$0xf]
  %v78 = vld [vmem:[%s1 + $0x20] sm:$0xf]
  %v79 = vld [vmem:[%s1 + $0x24] sm:$0xf]
  %v80 = vld [vmem:[%s1 + $0x28] sm:$0xf]
  %v81 = vld [vmem:[%s1 + $0x2c] sm:$0xf]
  %v82 = vld [vmem:[%s1 + $0x30] sm:$0xf]
  %v83 = vld [vmem:[%s1 + $0x34] sm:$0xf]
  %v84 = vld [vmem:[%s1 + $0x38] sm:$0xf]
  %v85 = vld [vmem:[%s1 + $0x3c] sm:$0xf]
  %v102 = vunpack.c.l.b16 %v54
  %v103 = vunpack.c.l.b16 %v55
  %v104 = vunpack.c.l.b16 %v56
  %v105 = vunpack.c.l.b16 %v57
  %v106 = vunpack.c.l.b16 %v58
  %v107 = vunpack.c.l.b16 %v59
  %v108 = vunpack.c.l.b16 %v60
  %v109 = vunpack.c.l.b16 %v61
  %v110 = vunpack.c.l.b16 %v62
  %v111 = vunpack.c.l.b16 %v63
  %v112 = vunpack.c.l.b16 %v64
  %v113 = vunpack.c.l.b16 %v65
  %v114 = vunpack.c.l.b16 %v66
  %v115 = vunpack.c.l.b16 %v67
  %v116 = vunpack.c.l.b16 %v68
  %v117 = vunpack.c.l.b16 %v69
  %v118 = vpack.c.b16 %v103, %v102
  %v119 = vpack.c.b16 %v105, %v104
  %v120 = vpack.c.b16 %v107, %v106
  %v121 = vpack.c.b16 %v109, %v108
  %v122 = vpack.c.b16 %v111, %v110
  %v123 = vpack.c.b16 %v113, %v112
  %v124 = vpack.c.b16 %v115, %v114
  %v125 = vpack.c.b16 %v117, %v116
  %v150 = vunpack.c.l.b16 %v70
  %v151 = vunpack.c.l.b16 %v71
  %v152 = vunpack.c.l.b16 %v72
  %v153 = vunpack.c.l.b16 %v73
  %v154 = vunpack.c.l.b16 %v74
  %v155 = vunpack.c.l.b16 %v75
  %v156 = vunpack.c.l.b16 %v76
  %v157 = vunpack.c.l.b16 %v77
  %v158 = vunpack.c.l.b16 %v78
  %v159 = vunpack.c.l.b16 %v79
  %v160 = vunpack.c.l.b16 %v80
  %v161 = vunpack.c.l.b16 %v81
  %v162 = vunpack.c.l.b16 %v82
  %v163 = vunpack.c.l.b16 %v83
  %v164 = vunpack.c.l.b16 %v84
  %v165 = vunpack.c.l.b16 %v85
  %v166 = vpack.c.b16 %v151, %v150
  %v167 = vpack.c.b16 %v153, %v152
  %v168 = vpack.c.b16 %v155, %v154
  %v169 = vpack.c.b16 %v157, %v156
  %v170 = vpack.c.b16 %v159, %v158
  %v171 = vpack.c.b16 %v161, %v160
  %v172 = vpack.c.b16 %v163, %v162
  %v173 = vpack.c.b16 %v165, %v164
  %182 = vmatprep.subr.bf16.mxu0 0
  %183 = vmatpush1.bf16.msra.mxu0 %v166
  %184 = vmatprep.subr.bf16.mxu0 0
  %185 = vmatpush1.bf16.msra.mxu0 %v167
  %186 = vmatprep.subr.bf16.mxu0 0
  %187 = vmatpush1.bf16.msra.mxu0 %v168
  %188 = vmatprep.subr.bf16.mxu0 0
  %189 = vmatpush1.bf16.msra.mxu0 %v169
  %190 = vmatprep.subr.bf16.mxu0 0
  %191 = vmatpush1.bf16.msra.mxu0 %v170
  %192 = vmatprep.subr.bf16.mxu0 0
  %193 = vmatpush1.bf16.msra.mxu0 %v171
  %194 = vmatprep.subr.bf16.mxu0 0
  %195 = vmatpush1.bf16.msra.mxu0 %v172
  %196 = vmatprep.subr.bf16.mxu0 0
  %197 = vmatpush1.bf16.msra.mxu0 %v173
  %198 = vmatprep.subr.bf16.mxu0 0
  %199 = vmatpush1.bf16.msra.mxu0 0
  %200 = vmatprep.subr.bf16.mxu0 0
  %201 = vmatpush1.bf16.msra.mxu0 0
  %202 = vmatprep.subr.bf16.mxu0 0
  %203 = vmatpush1.bf16.msra.mxu0 0
  %204 = vmatprep.subr.bf16.mxu0 0
  %205 = vmatpush1.bf16.msra.mxu0 0
  %206 = vmatprep.subr.bf16.mxu0 0
  %207 = vmatpush1.bf16.msra.mxu0 0
  %208 = vmatprep.subr.bf16.mxu0 0
  %209 = vmatpush1.bf16.msra.mxu0 0
  %210 = vmatprep.subr.bf16.mxu0 0
  %211 = vmatpush1.bf16.msra.mxu0 0
  %212 = vmatprep.subr.bf16.mxu0 0
  %213 = vmatpush1.bf16.msra.mxu0 0
  %214 = vmatprep.mubr.bf16.mxu0 0
  %215 = vmatmul.mubr.bf16.gmra.mrb[0].mxu0 %v118
  %v216 = vpop.f32.mrb[0].mxu0
  %v217 = vadd.f32 0.0, %v216
  %v218 = vpop.f32.mrb[0].mxu0
  %v219 = vpop.f32.mrb[0].mxu0
  %v220 = vadd.f32 0.0, %v219
  %v221 = vpop.f32.mrb[0].mxu0
  %222 = vmatprep.mubr.bf16.mxu0 0
  %223 = vmatmul.mubr.bf16.gmra.mrb[0].mxu0 %v119
  %v224 = vpop.f32.mrb[0].mxu0
  %v225 = vadd.f32 0.0, %v224
  %v226 = vpop.f32.mrb[0].mxu0
  %v227 = vpop.f32.mrb[0].mxu0
  %v228 = vadd.f32 0.0, %v227
  %v229 = vpop.f32.mrb[0].mxu0
  %230 = vmatprep.mubr.bf16.mxu0 0
  %231 = vmatmul.mubr.bf16.gmra.mrb[0].mxu0 %v120
  %v232 = vpop.f32.mrb[0].mxu0
  %v233 = vadd.f32 0.0, %v232
  %v234 = vpop.f32.mrb[0].mxu0
  %v235 = vpop.f32.mrb[0].mxu0
  %v236 = vadd.f32 0.0, %v235
  %v237 = vpop.f32.mrb[0].mxu0
  %238 = vmatprep.mubr.bf16.mxu0 0
  %239 = vmatmul.mubr.bf16.gmra.mrb[0].mxu0 %v121
  %v240 = vpop.f32.mrb[0].mxu0
  %v241 = vadd.f32 0.0, %v240
  %v242 = vpop.f32.mrb[0].mxu0
  %v243 = vpop.f32.mrb[0].mxu0
  %v244 = vadd.f32 0.0, %v243
  %v245 = vpop.f32.mrb[0].mxu0
  %246 = vmatprep.mubr.bf16.mxu0 0
  %247 = vmatmul.mubr.bf16.gmra.mrb[0].mxu0 %v122
  %v248 = vpop.f32.mrb[0].mxu0
  %v249 = vadd.f32 0.0, %v248
  %v250 = vpop.f32.mrb[0].mxu0
  %v251 = vpop.f32.mrb[0].mxu0
  %v252 = vadd.f32 0.0, %v251
  %v253 = vpop.f32.mrb[0].mxu0
  %254 = vmatprep.mubr.bf16.mxu0 0
  %255 = vmatmul.mubr.bf16.gmra.mrb[0].mxu0 %v123
  %v256 = vpop.f32.mrb[0].mxu0
  %v257 = vadd.f32 0.0, %v256
  %v258 = vpop.f32.mrb[0].mxu0
  %v259 = vpop.f32.mrb[0].mxu0
  %v260 = vadd.f32 0.0, %v259
  %v261 = vpop.f32.mrb[0].mxu0
  %262 = vmatprep.mubr.bf16.mxu0 0
  %263 = vmatmul.mubr.bf16.gmra.mrb[0].mxu0 %v124
  %v264 = vpop.f32.mrb[0].mxu0
  %v265 = vadd.f32 0.0, %v264
  %v266 = vpop.f32.mrb[0].mxu0
  %v267 = vpop.f32.mrb[0].mxu0
  %v268 = vadd.f32 0.0, %v267
  %v269 = vpop.f32.mrb[0].mxu0
  %270 = vmatprep.mubr.bf16.mxu0 0
  %271 = vmatmul.mubr.bf16.gmra.mrb[0].mxu0 %v125
  %v272 = vpop.f32.mrb[0].mxu0
  %v273 = vadd.f32 0.0, %v272
  %v274 = vpop.f32.mrb[0].mxu0
  %v275 = vpop.f32.mrb[0].mxu0
  %v276 = vadd.f32 0.0, %v275
  %v277 = vpop.f32.mrb[0].mxu0
  %278 = vdwg.mxu0
  %v279 = vadd.f32 %v38, %v217
  %v280 = vadd.f32 %v39, %v220
  %v281 = vadd.f32 %v40, %v225
  %v282 = vadd.f32 %v41, %v228
  %v283 = vadd.f32 %v42, %v233
  %v284 = vadd.f32 %v43, %v236
  %v285 = vadd.f32 %v44, %v241
  %v286 = vadd.f32 %v45, %v244
  %v287 = vadd.f32 %v46, %v249
  %v288 = vadd.f32 %v47, %v252
  %v289 = vadd.f32 %v48, %v257
  %v290 = vadd.f32 %v49, %v260
  %v291 = vadd.f32 %v50, %v265
  %v292 = vadd.f32 %v51, %v268
  %v293 = vadd.f32 %v52, %v273
  %v294 = vadd.f32 %v53, %v276
  %295 = vst [vmem:[#allocation2] sm:$0xff] %v279
  %296 = vst [vmem:[#allocation2 + $0x8] sm:$0xff] %v280
  %297 = vst [vmem:[#allocation2 + $0x10] sm:$0xff] %v281
  %298 = vst [vmem:[#allocation2 + $0x18] sm:$0xff] %v282
  %299 = vst [vmem:[#allocation2 + $0x20] sm:$0xff] %v283
  %300 = vst [vmem:[#allocation2 + $0x28] sm:$0xff] %v284
  %301 = vst [vmem:[#allocation2 + $0x30] sm:$0xff] %v285
  %302 = vst [vmem:[#allocation2 + $0x38] sm:$0xff] %v286
  %303 = vst [vmem:[#allocation2 + $0x40] sm:$0xff] %v287
  %304 = vst [vmem:[#allocation2 + $0x48] sm:$0xff] %v288
  %305 = vst [vmem:[#allocation2 + $0x50] sm:$0xff] %v289
  %306 = vst [vmem:[#allocation2 + $0x58] sm:$0xff] %v290
  %307 = vst [vmem:[#allocation2 + $0x60] sm:$0xff] %v291
  %308 = vst [vmem:[#allocation2 + $0x68] sm:$0xff] %v292
  %309 = vst [vmem:[#allocation2 + $0x70] sm:$0xff] %v293
  %310 = vst [vmem:[#allocation2 + $0x78] sm:$0xff] %v294
  // Predicated region
  $region22: #{basic_block_forward.5} parent=0 // pred_check
    %p311 = pneg %p18
  $region23: #{basic_block_forward.5} parent=0 // pred_check_branch
    %313 = sbr.rel (%p311) target = $region25
  $region24: #{basic_block_forward.5} parent=0 // pred_region
    %v314 = vld [vmem:[#allocation2] sm:$0xff]
    %v315 = vld [vmem:[#allocation2 + $0x8] sm:$0xff]
    %v316 = vld [vmem:[#allocation2 + $0x10] sm:$0xff]
    %v317 = vld [vmem:[#allocation2 + $0x18] sm:$0xff]
    %v318 = vld [vmem:[#allocation2 + $0x20] sm:$0xff]
    %v319 = vld [vmem:[#allocation2 + $0x28] sm:$0xff]
    %v320 = vld [vmem:[#allocation2 + $0x30] sm:$0xff]
    %v321 = vld [vmem:[#allocation2 + $0x38] sm:$0xff]
    %v322 = vld [vmem:[#allocation2 + $0x40] sm:$0xff]
    %v323 = vld [vmem:[#allocation2 + $0x48] sm:$0xff]
    %v324 = vld [vmem:[#allocation2 + $0x50] sm:$0xff]
    %v325 = vld [vmem:[#allocation2 + $0x58] sm:$0xff]
    %v326 = vld [vmem:[#allocation2 + $0x60] sm:$0xff]
    %v327 = vld [vmem:[#allocation2 + $0x68] sm:$0xff]
    %v328 = vld [vmem:[#allocation2 + $0x70] sm:$0xff]
    %v329 = vld [vmem:[#allocation2 + $0x78] sm:$0xff]
    %v330 = vld [vmem:[%s2] sm:$0x1]
    %v332 = vlaneseq
    %v333 = vshrl.u32 %v332, 7
    %v334 = vsub.s32 0, %v333
    %v335 = vrot.slane %v330, %v334
    %v337 = vadd.f32 %v314, %v335
    %v338 = vadd.f32 %v315, %v335
    %v339 = vadd.f32 %v316, %v335
    %v340 = vadd.f32 %v317, %v335
    %v341 = vadd.f32 %v318, %v335
    %v342 = vadd.f32 %v319, %v335
    %v343 = vadd.f32 %v320, %v335
    %v344 = vadd.f32 %v321, %v335
    %v345 = vadd.f32 %v322, %v335
    %v346 = vadd.f32 %v323, %v335
    %v347 = vadd.f32 %v324, %v335
    %v348 = vadd.f32 %v325, %v335
    %v349 = vadd.f32 %v326, %v335
    %v350 = vadd.f32 %v327, %v335
    %v351 = vadd.f32 %v328, %v335
    %v352 = vadd.f32 %v329, %v335
    %v353 = vld [vmem:[%s3] sm:$0xf]
    %v354 = vld [vmem:[%s3 + $0x4] sm:$0xf]
    %v355 = vld [vmem:[%s3 + $0x8] sm:$0xf]
    %v356 = vld [vmem:[%s3 + $0xc] sm:$0xf]
    %v357 = vld [vmem:[%s3 + $0x10] sm:$0xf]
    %v358 = vld [vmem:[%s3 + $0x14] sm:$0xf]
    %v359 = vld [vmem:[%s3 + $0x18] sm:$0xf]
    %v360 = vld [vmem:[%s3 + $0x1c] sm:$0xf]
    %v361 = vld [vmem:[%s3 + $0x20] sm:$0xf]
    %v362 = vld [vmem:[%s3 + $0x24] sm:$0xf]
    %v363 = vld [vmem:[%s3 + $0x28] sm:$0xf]
    %v364 = vld [vmem:[%s3 + $0x2c] sm:$0xf]
    %v365 = vld [vmem:[%s3 + $0x30] sm:$0xf]
    %v366 = vld [vmem:[%s3 + $0x34] sm:$0xf]
    %v367 = vld [vmem:[%s3 + $0x38] sm:$0xf]
    %v368 = vld [vmem:[%s3 + $0x3c] sm:$0xf]
    %v369 = vunpack.c.l.bf16 %v353
    %v370 = vunpack.c.l.bf16 %v354
    %v371 = vunpack.c.l.bf16 %v355
    %v372 = vunpack.c.l.bf16 %v356
    %v373 = vunpack.c.l.bf16 %v357
    %v374 = vunpack.c.l.bf16 %v358
    %v375 = vunpack.c.l.bf16 %v359
    %v376 = vunpack.c.l.bf16 %v360
    %v377 = vunpack.c.l.bf16 %v361
    %v378 = vunpack.c.l.bf16 %v362
    %v379 = vunpack.c.l.bf16 %v363
    %v380 = vunpack.c.l.bf16 %v364
    %v381 = vunpack.c.l.bf16 %v365
    %v382 = vunpack.c.l.bf16 %v366
    %v383 = vunpack.c.l.bf16 %v367
    %v384 = vunpack.c.l.bf16 %v368
    %v385 = vadd.f32 %v337, %v369
    %v386 = vadd.f32 %v338, %v370
    %v387 = vadd.f32 %v339, %v371
    %v388 = vadd.f32 %v340, %v372
    %v389 = vadd.f32 %v341, %v373
    %v390 = vadd.f32 %v342, %v374
    %v391 = vadd.f32 %v343, %v375
    %v392 = vadd.f32 %v344, %v376
    %v393 = vadd.f32 %v345, %v377
    %v394 = vadd.f32 %v346, %v378
    %v395 = vadd.f32 %v347, %v379
    %v396 = vadd.f32 %v348, %v380
    %v397 = vadd.f32 %v349, %v381
    %v398 = vadd.f32 %v350, %v382
    %v399 = vadd.f32 %v351, %v383
    %v400 = vadd.f32 %v352, %v384
    %v401 = vmax.f32 %v385, 0.0
    %v402 = vmax.f32 %v386, 0.0
    %v403 = vmax.f32 %v387, 0.0
    %v404 = vmax.f32 %v388, 0.0
    %v405 = vmax.f32 %v389, 0.0
    %v406 = vmax.f32 %v390, 0.0
    %v407 = vmax.f32 %v391, 0.0
    %v408 = vmax.f32 %v392, 0.0
    %v409 = vmax.f32 %v393, 0.0
    %v410 = vmax.f32 %v394, 0.0
    %v411 = vmax.f32 %v395, 0.0
    %v412 = vmax.f32 %v396, 0.0
    %v413 = vmax.f32 %v397, 0.0
    %v414 = vmax.f32 %v398, 0.0
    %v415 = vmax.f32 %v399, 0.0
    %v416 = vmax.f32 %v400, 0.0
    %417 = vst [vmem:[%s4] sm:$0xff] %v401
    %418 = vst [vmem:[%s4 + $0x8] sm:$0xff] %v402
    %419 = vst [vmem:[%s4 + $0x10] sm:$0xff] %v403
    %420 = vst [vmem:[%s4 + $0x18] sm:$0xff] %v404
    %421 = vst [vmem:[%s4 + $0x20] sm:$0xff] %v405
    %422 = vst [vmem:[%s4 + $0x28] sm:$0xff] %v406
    %423 = vst [vmem:[%s4 + $0x30] sm:$0xff] %v407
    %424 = vst [vmem:[%s4 + $0x38] sm:$0xff] %v408
    %425 = vst [vmem:[%s4 + $0x40] sm:$0xff] %v409
    %426 = vst [vmem:[%s4 + $0x48] sm:$0xff] %v410
    %427 = vst [vmem:[%s4 + $0x50] sm:$0xff] %v411
    %428 = vst [vmem:[%s4 + $0x58] sm:$0xff] %v412
    %429 = vst [vmem:[%s4 + $0x60] sm:$0xff] %v413
    %430 = vst [vmem:[%s4 + $0x68] sm:$0xff] %v414
    %431 = vst [vmem:[%s4 + $0x70] sm:$0xff] %v415
    %432 = vst [vmem:[%s4 + $0x78] sm:$0xff] %v416
  $region25: #{basic_block_forward.5} parent=0 // pred_fallthru
    _
  // Predicated region
  $region26: #{basic_block_forward.5} parent=0 // pred_check
    _
  $region27: #{basic_block_forward.5} parent=0 // pred_check_branch
    %434 = sbr.rel (0) target = $region29
  $region28: #{basic_block_forward.5} parent=0 // pred_region
    _
  $region29: #{basic_block_forward.5} parent=0 // pred_fallthru
    _
  // Predicated region
  $region30: #{basic_block_forward.5} parent=0 // pred_check
    _
  $region31: #{basic_block_forward.5} parent=0 // pred_check_branch
    %436 = sbr.rel (0) target = $region33
  $region32: #{basic_block_forward.5} parent=0 // pred_region
    _
  $region33: #{basic_block_forward.5} parent=0 // pred_fallthru
    _

</llo_original>
